<compile_context>
chip_gen: v5e
topology: v5e:2x2
jax: 0.10.0
libtpu: 0.0.40
codegen_flags: <defaults>
</compile_context>

<pallas_src>
import functools
from typing import NamedTuple

import jax
import jax.numpy as jnp
from jax.experimental import pallas as pl
from jax.experimental.pallas import tpu as pltpu


def _round_up(n, m):
    return ((n + m - 1) // m) * m


def mlp_kernel(x_ref, w1_ref, b1_ref, w2_ref, b2_ref, w3_ref, b3_ref,
               o_ref, acc_ref):
    """One (batch-tile, K-tile) grid step of the 3-layer MLP."""
    k = pl.program_id(1)

    @pl.when(k == 0)
    def _():
        acc_ref[...] = jnp.zeros_like(acc_ref)

    # Layer-1 partial product, accumulated over the flattened-input (K) axis.
    acc_ref[...] += jnp.dot(x_ref[...], w1_ref[...],
                            preferred_element_type=jnp.float32)

    @pl.when(k == pl.num_programs(1) - 1)
    def _():
        # Layer-1 epilogue + layers 2/3 (bias + ReLU kept in f32).
        h1 = jnp.maximum(acc_ref[...] + b1_ref[...], 0.0)
        h2 = jnp.dot(h1.astype(w2_ref.dtype), w2_ref[...],
                     preferred_element_type=jnp.float32)
        h2 = jnp.maximum(h2 + b2_ref[...], 0.0)
        h3 = jnp.dot(h2.astype(w3_ref.dtype), w3_ref[...],
                     preferred_element_type=jnp.float32)
        o_ref[...] = jnp.maximum(h3 + b3_ref[...], 0.0).astype(o_ref.dtype)


class NetParams(NamedTuple):
    """Padded, pre-cast parameters (built once by prepare_params)."""
    w1: jax.Array   # (in_pp, f_p) compute dtype
    b1: jax.Array   # (1, f_p)     f32
    w2: jax.Array   # (f_p, f_p)
    b2: jax.Array   # (1, f_p)
    w3: jax.Array   # (f_p, o_p)
    b3: jax.Array   # (1, o_p)


class NetConfig(NamedTuple):
    out_dim: int    # logical output width (for un-padding)
    tk: int         # K tile over the flattened input dim


# Per-buffer budget for the layer-1 weight block: keeps the whole working set
# comfortably under v7x's 64 MiB VMEM even with double-buffered x/w1 tiles.
_W1_BLOCK_BUDGET = 16 << 20


def _choose_tk(in_p, f_p, itemsize):
    if in_p * f_p * itemsize <= _W1_BLOCK_BUDGET:
        return int(in_p)
    tk = (_W1_BLOCK_BUDGET // (f_p * itemsize)) // 128 * 128
    return int(max(128, min(tk, in_p)))


def _choose_tb(batch, tile_b):
    b8 = _round_up(batch, 8)
    tb = min(_round_up(tile_b, 8), b8)
    # v7x has 2 TensorCores: give the "parallel" batch axis >= 2 grid steps
    # whenever the batch allows, so neither core idles (no-op on v5e/v6e).
    if b8 >= 16:
        tb = min(tb, _round_up(pl.cdiv(b8, 2), 8))
    return tb


def prepare_params(params, *, compute_dtype=jnp.float32):
    """Pad/cast weights once, outside the per-forward path.

    Weights are stored (fan_in, fan_out) so the kernel computes x @ W + b.
    All padding is zeros -> exact math (zero rows/cols contribute nothing and
    ReLU(0) = 0). Biases stay f32. bf16 operands are valid on v5e/v6e/v7x
    alike: the MXU takes bf16 inputs with f32 accumulation; only the dominant
    weight/x HBM streams shrink. Note compute_dtype also applies to x.
    """
    w1, b1, w2, b2, w3, b3 = params
    in_dim, feat = w1.shape
    out_dim = w3.shape[1]
    itemsize = jnp.dtype(compute_dtype).itemsize

    in_p = _round_up(in_dim, 128)
    f_p = _round_up(feat, 128)
    o_p = _round_up(out_dim, 128)
    tk = _choose_tk(in_p, f_p, itemsize)
    n_k = pl.cdiv(in_p, tk)
    in_pp = n_k * tk

    def pad2(a, shape, dtype):
        return jnp.zeros(shape, dtype).at[:a.shape[0], :a.shape[1]].set(
            a.astype(dtype))

    prepared = NetParams(
        w1=pad2(w1, (in_pp, f_p), compute_dtype),
        b1=pad2(b1.reshape(1, -1), (1, f_p), jnp.float32),
        w2=pad2(w2, (f_p, f_p), compute_dtype),
        b2=pad2(b2.reshape(1, -1), (1, f_p), jnp.float32),
        w3=pad2(w3, (f_p, o_p), compute_dtype),
        b3=pad2(b3.reshape(1, -1), (1, o_p), jnp.float32),
    )
    return prepared, NetConfig(out_dim=int(out_dim), tk=int(tk))


@functools.partial(
    jax.jit, static_argnames=("cfg", "tile_b", "single_buffer_weights"))
def net_forward(x_nchw, prepared, cfg, *, tile_b=512,
                single_buffer_weights=True):
    """Forward pass matching Net.forward. x_nchw: (B, C, H, W)."""
    w1p, b1p, w2p, b2p, w3p, b3p = prepared
    in_pp, f_p = w1p.shape
    o_p = w3p.shape[1]
    tk = cfg.tk
    n_k = in_pp // tk
    wdt = w1p.dtype
    itemsize = jnp.dtype(wdt).itemsize

    B = x_nchw.shape[0]
    # nn.Flatten(): (B, C, H, W) -> (B, C*H*W), row-major (same as PyTorch).
    x2d = x_nchw.reshape(B, -1)
    in_dim = x2d.shape[1]
    assert in_dim <= in_pp

    tb = _choose_tb(B, tile_b)
    b_p = _round_up(B, tb)
    n_b = b_p // tb

    # Build x directly in the compute dtype; skip the padded copy entirely
    # when the layout is already kernel-ready (exact math either way).
    if B == b_p and in_dim == in_pp:
        xp = x2d.astype(wdt)
    else:
        xp = jnp.zeros((b_p, in_pp), wdt).at[:B, :in_dim].set(x2d.astype(wdt))

    # Constant-index weights/biases never change across the grid: one VMEM
    # buffer is enough (halves resident-weight VMEM; matters most on v7x).
    const_mode = pl.Buffered(1) if single_buffer_weights else None
    w1_mode = const_mode if n_k == 1 else None   # w1 streams when K-tiled

    # Explicit VMEM budget: double-buffered x/out tiles, weight residents,
    # f32 accumulator + epilogue temporaries, with headroom.
    w1_bufs = 1 if (single_buffer_weights and n_k == 1) else 2
    const_bufs = 1 if single_buffer_weights else 2
    vmem_bytes = (
        2 * tb * tk * itemsize                                 # x tiles
        + w1_bufs * tk * f_p * itemsize                        # w1 block(s)
        + const_bufs * (f_p * f_p + f_p * o_p) * itemsize      # w2, w3
        + const_bufs * (2 * f_p + o_p) * 4                     # biases (f32)
        + 2 * tb * o_p * 4                                     # out tiles
        + tb * f_p * 4                                         # acc scratch
        + 2 * tb * f_p * 4)                                    # h1/h2 temps
    vmem_limit = int(min(max(int(vmem_bytes * 1.5) + (2 << 20), 32 << 20),
                         64 << 20))

    flops = 2 * b_p * (in_pp * f_p + f_p * f_p + f_p * o_p)
    bytes_accessed = (
        b_p * in_pp * itemsize
        + (in_pp * f_p + f_p * f_p + f_p * o_p) * itemsize
        + (2 * f_p + o_p) * 4
        + b_p * o_p * 4)

    out_p = pl.pallas_call(
        mlp_kernel,
        out_shape=jax.ShapeDtypeStruct((b_p, o_p), jnp.float32),
        grid_spec=pltpu.PrefetchScalarGridSpec(
            num_scalar_prefetch=0,
            grid=(n_b, n_k),      # reduction (K) axis last, by convention
            in_specs=[
                pl.BlockSpec((tb, tk), lambda i, k: (i, k)),           # x
                pl.BlockSpec((tk, f_p), lambda i, k: (k, 0),
                             pipeline_mode=w1_mode),                   # w1
                pl.BlockSpec((1, f_p), lambda i, k: (0, 0),
                             pipeline_mode=const_mode),                # b1
                pl.BlockSpec((f_p, f_p), lambda i, k: (0, 0),
                             pipeline_mode=const_mode),                # w2
                pl.BlockSpec((1, f_p), lambda i, k: (0, 0),
                             pipeline_mode=const_mode),                # b2
                pl.BlockSpec((f_p, o_p), lambda i, k: (0, 0),
                             pipeline_mode=const_mode),                # w3
                pl.BlockSpec((1, o_p), lambda i, k: (0, 0),
                             pipeline_mode=const_mode),                # b3
            ],
            out_specs=pl.BlockSpec((tb, o_p), lambda i, k: (i, 0)),
            scratch_shapes=[pltpu.VMEM((tb, f_p), jnp.float32)],
        ),
        compiler_params=pltpu.CompilerParams(
            dimension_semantics=("parallel", "arbitrary"),
            vmem_limit_bytes=vmem_limit),
        cost_estimate=pl.CostEstimate(
            flops=flops, transcendentals=0, bytes_accessed=bytes_accessed),
    )(xp, w1p, b1p, w2p, b2p, w3p, b3p)

    # Strip batch / lane padding back to the logical output.
    return out_p[:B, :cfg.out_dim]


def init_params(key, in_dim, feature_dim, out_dim):
    """Deterministic init mimicking nn.Linear's uniform(-1/sqrt(fan_in), .)."""
    def linear(k, fan_in, fan_out):
        kw, kb = jax.random.split(k)
        bound = 1.0 / jnp.sqrt(fan_in)
        # stored as (fan_in, fan_out) so the kernel does x @ W + b
        w = jax.random.uniform(kw, (fan_in, fan_out), jnp.float32, -bound, bound)
        b = jax.random.uniform(kb, (1, fan_out), jnp.float32, -bound, bound)
        return w, b

    k1, k2, k3 = jax.random.split(key, 3)
    w1, b1 = linear(k1, in_dim, feature_dim)
    w2, b2 = linear(k2, feature_dim, feature_dim)
    w3, b3 = linear(k3, feature_dim, out_dim)
    return (w1, b1, w2, b2, w3, b3)


def reference_forward(x, params):
    """Pure-JAX reference with exact PyTorch forward semantics."""
    w1, b1, w2, b2, w3, b3 = params
    h = x.reshape(x.shape[0], -1)
    h = jnp.maximum(h @ w1 + b1, 0.0)
    h = jnp.maximum(h @ w2 + b2, 0.0)
    return jnp.maximum(h @ w3 + b3, 0.0)


if __name__ == "__main__":
    # Small shapes: x is NCHW (2, 4, 16, 16) -> in_dim = 4*16*16 = 1024
    B, C, H, W = 2, 4, 16, 16
    in_dim = C * H * W
    feature_dim = 32
    out_dim = 8

    key = jax.random.PRNGKey(0)
    kx, kp, kx2 = jax.random.split(key, 3)
    x = jax.random.normal(kx, (B, C, H, W), dtype=jnp.float32)
    params = init_params(kp, in_dim, feature_dim, out_dim)
    ref = reference_forward(x, params)

    # Pad/cast the weights ONCE (outside the per-forward path).
    prep_f32, cfg_f32 = prepare_params(params, compute_dtype=jnp.float32)
    prep_bf16, cfg_bf16 = prepare_params(params, compute_dtype=jnp.bfloat16)

    # f32 path: exact-semantics check. Single-buffered constant weights by
    # default; fall back to default buffering if this jax build rejects
    # pipeline_mode on pallas_call BlockSpecs.
    sbw = True
    try:
        out = jax.block_until_ready(
            net_forward(x, prep_f32, cfg_f32, single_buffer_weights=sbw))
    except Exception:
        sbw = False
        out = jax.block_until_ready(
            net_forward(x, prep_f32, cfg_f32, single_buffer_weights=sbw))
    assert out.shape == (B, out_dim)
    assert jnp.allclose(out, ref, atol=1e-5, rtol=1e-5)

    # bf16 operand path (f32 MXU accumulation; valid on v5e/v6e/v7x).
    out_bf16 = jax.block_until_ready(
        net_forward(x, prep_bf16, cfg_bf16, single_buffer_weights=sbw))
    assert out_bf16.shape == (B, out_dim)
    assert jnp.allclose(out_bf16, ref, atol=5e-2, rtol=5e-2)

    # Larger ragged batch: exercises batch padding and the >=2-step
    # "parallel" batch grid (v7x megacore path).
    B2 = 190
    x2 = jax.random.normal(kx2, (B2, C, H, W), dtype=jnp.float32)
    ref2 = reference_forward(x2, params)
    out2 = jax.block_until_ready(
        net_forward(x2, prep_f32, cfg_f32, single_buffer_weights=sbw))
    assert out2.shape == (B2, out_dim)
    assert jnp.allclose(out2, ref2, atol=1e-4, rtol=1e-4)

    print("KERNEL_OK")
</pallas_src>

<mosaic_0001>
module attributes {stable_mosaic.version = 11 : i64} {
  func.func @mlp_kernel(%arg0: i32, %arg1: i32, %arg2: memref<8x1024xf32, #tpu.memory_space<vmem>>, %arg3: memref<1024x128xf32, #tpu.memory_space<vmem>>, %arg4: memref<1x128xf32, #tpu.memory_space<vmem>>, %arg5: memref<128x128xf32, #tpu.memory_space<vmem>>, %arg6: memref<1x128xf32, #tpu.memory_space<vmem>>, %arg7: memref<128x128xf32, #tpu.memory_space<vmem>>, %arg8: memref<1x128xf32, #tpu.memory_space<vmem>>, %arg9: memref<8x128xf32, #tpu.memory_space<vmem>>, %arg10: memref<8x128xf32, #tpu.memory_space<vmem>>) attributes {dimension_semantics = [#tpu.dimension_semantics<parallel>, #tpu.dimension_semantics<arbitrary>], iteration_bounds = array<i64: 1, 1>, scalar_prefetch = 0 : i64, scratch_operands = 1 : i64, tpu.core_type = #tpu.core_type<tc>, window_params = [{transform_indices = @transform_0, window_bounds = array<i64: 8, 1024>}, {pipeline_mode = #tpu.pipeline_mode<synchronous>, transform_indices = @transform_1, window_bounds = array<i64: 1024, 128>}, {pipeline_mode = #tpu.pipeline_mode<synchronous>, transform_indices = @transform_2, window_bounds = array<i64: 1, 128>}, {pipeline_mode = #tpu.pipeline_mode<synchronous>, transform_indices = @transform_3, window_bounds = array<i64: 128, 128>}, {pipeline_mode = #tpu.pipeline_mode<synchronous>, transform_indices = @transform_4, window_bounds = array<i64: 1, 128>}, {pipeline_mode = #tpu.pipeline_mode<synchronous>, transform_indices = @transform_5, window_bounds = array<i64: 128, 128>}, {pipeline_mode = #tpu.pipeline_mode<synchronous>, transform_indices = @transform_6, window_bounds = array<i64: 1, 128>}, {transform_indices = @transform_7, window_bounds = array<i64: 8, 128>}]} {
    %c0_i32 = arith.constant 0 : i32
    %0 = arith.cmpi eq, %arg1, %c0_i32 : i32
    %1 = arith.extui %0 : i1 to i32
    %c0_i32_0 = arith.constant 0 : i32
    %2 = arith.cmpi ne, %1, %c0_i32_0 : i32
    scf.if %2 {
      %cst_10 = arith.constant 0.000000e+00 : f32
      %12 = vector.broadcast %cst_10 : f32 to vector<8x128xf32>
      %c0_11 = arith.constant 0 : index
      %c0_12 = arith.constant 0 : index
      %13 = vector.load %arg10[%c0_11, %c0_12] : memref<8x128xf32, #tpu.memory_space<vmem>>, vector<8x128xf32>
      tpu.vector_store %arg10[%c0_11, %c0_12], %12 {strides = array<i32>} : memref<8x128xf32, #tpu.memory_space<vmem>>, vector<8x128xf32>,
    } else {
    }
    %c0 = arith.constant 0 : index
    %c0_1 = arith.constant 0 : index
    %3 = vector.load %arg10[%c0, %c0_1] : memref<8x128xf32, #tpu.memory_space<vmem>>, vector<8x128xf32>
    %c0_2 = arith.constant 0 : index
    %c0_3 = arith.constant 0 : index
    %4 = vector.load %arg2[%c0_2, %c0_3] : memref<8x1024xf32, #tpu.memory_space<vmem>>, vector<8x1024xf32>
    %c0_4 = arith.constant 0 : index
    %c0_5 = arith.constant 0 : index
    %5 = vector.load %arg3[%c0_4, %c0_5] : memref<1024x128xf32, #tpu.memory_space<vmem>>, vector<1024x128xf32>
    %cst = arith.constant dense<0.000000e+00> : vector<8x128xf32>
    %6 = tpu.matmul %4, %5, %cst {dimension_numbers = #tpu.dot_dimension_numbers<[1], [0], [0], [1], [0, 0, 1, 1], [], []>} : vector<8x1024xf32>, vector<1024x128xf32>, vector<8x128xf32> -> vector<8x128xf32>
    %7 = arith.addf %3, %6 : vector<8x128xf32>
    %c0_6 = arith.constant 0 : index
    %c0_7 = arith.constant 0 : index
    %8 = vector.load %arg10[%c0_6, %c0_7] : memref<8x128xf32, #tpu.memory_space<vmem>>, vector<8x128xf32>
    tpu.vector_store %arg10[%c0_6, %c0_7], %7 {strides = array<i32>} : memref<8x128xf32, #tpu.memory_space<vmem>>, vector<8x128xf32>,
    %c0_i32_8 = arith.constant 0 : i32
    %9 = arith.cmpi eq, %arg1, %c0_i32_8 : i32
    %10 = arith.extui %9 : i1 to i32
    %c0_i32_9 = arith.constant 0 : i32
    %11 = arith.cmpi ne, %10, %c0_i32_9 : i32
    scf.if %11 {
      %c0_10 = arith.constant 0 : index
      %c0_11 = arith.constant 0 : index
      %12 = vector.load %arg10[%c0_10, %c0_11] : memref<8x128xf32, #tpu.memory_space<vmem>>, vector<8x128xf32>
      %c0_12 = arith.constant 0 : index
      %c0_13 = arith.constant 0 : index
      %13 = vector.load %arg4[%c0_12, %c0_13] : memref<1x128xf32, #tpu.memory_space<vmem>>, vector<1x128xf32>
      %14 = vector.broadcast %13 : vector<1x128xf32> to vector<8x128xf32>
      %15 = arith.addf %12, %14 : vector<8x128xf32>
      %cst_14 = arith.constant 0.000000e+00 : f32
      %16 = vector.broadcast %cst_14 : f32 to vector<8x128xf32>
      %17 = arith.maximumf %15, %16 : vector<8x128xf32>
      %c0_15 = arith.constant 0 : index
      %c0_16 = arith.constant 0 : index
      %18 = vector.load %arg5[%c0_15, %c0_16] : memref<128x128xf32, #tpu.memory_space<vmem>>, vector<128x128xf32>
      %cst_17 = arith.constant dense<0.000000e+00> : vector<8x128xf32>
      %19 = tpu.matmul %17, %18, %cst_17 {dimension_numbers = #tpu.dot_dimension_numbers<[1], [0], [0], [1], [0, 0, 1, 1], [], []>} : vector<8x128xf32>, vector<128x128xf32>, vector<8x128xf32> -> vector<8x128xf32>
      %c0_18 = arith.constant 0 : index
      %c0_19 = arith.constant 0 : index
      %20 = vector.load %arg6[%c0_18, %c0_19] : memref<1x128xf32, #tpu.memory_space<vmem>>, vector<1x128xf32>
      %21 = vector.broadcast %20 : vector<1x128xf32> to vector<8x128xf32>
      %22 = arith.addf %19, %21 : vector<8x128xf32>
      %cst_20 = arith.constant 0.000000e+00 : f32
      %23 = vector.broadcast %cst_20 : f32 to vector<8x128xf32>
      %24 = arith.maximumf %22, %23 : vector<8x128xf32>
      %c0_21 = arith.constant 0 : index
      %c0_22 = arith.constant 0 : index
      %25 = vector.load %arg7[%c0_21, %c0_22] : memref<128x128xf32, #tpu.memory_space<vmem>>, vector<128x128xf32>
      %cst_23 = arith.constant dense<0.000000e+00> : vector<8x128xf32>
      %26 = tpu.matmul %24, %25, %cst_23 {dimension_numbers = #tpu.dot_dimension_numbers<[1], [0], [0], [1], [0, 0, 1, 1], [], []>} : vector<8x128xf32>, vector<128x128xf32>, vector<8x128xf32> -> vector<8x128xf32>
      %c0_24 = arith.constant 0 : index
      %c0_25 = arith.constant 0 : index
      %27 = vector.load %arg8[%c0_24, %c0_25] : memref<1x128xf32, #tpu.memory_space<vmem>>, vector<1x128xf32>
      %28 = vector.broadcast %27 : vector<1x128xf32> to vector<8x128xf32>
      %29 = arith.addf %26, %28 : vector<8x128xf32>
      %cst_26 = arith.constant 0.000000e+00 : f32
      %30 = vector.broadcast %cst_26 : f32 to vector<8x128xf32>
      %31 = arith.maximumf %29, %30 : vector<8x128xf32>
      %c0_27 = arith.constant 0 : index
      %c0_28 = arith.constant 0 : index
      %32 = vector.load %arg9[%c0_27, %c0_28] : memref<8x128xf32, #tpu.memory_space<vmem>>, vector<8x128xf32>
      tpu.vector_store %arg9[%c0_27, %c0_28], %31 {strides = array<i32>} : memref<8x128xf32, #tpu.memory_space<vmem>>, vector<8x128xf32>,
    } else {
    }
    return
  }
  func.func @transform_0(%arg0: i32, %arg1: i32) -> (i32, i32) {
    %c0_i32 = arith.constant 0 : i32
    return %arg0, %arg1 : i32, i32
  }
  func.func @transform_1(%arg0: i32, %arg1: i32) -> (i32, i32) {
    %c0_i32 = arith.constant 0 : i32
    %c0_i32_0 = arith.constant 0 : i32
    return %arg1, %c0_i32 : i32, i32
  }
  func.func @transform_2(%arg0: i32, %arg1: i32) -> (i32, i32) {
    %c0_i32 = arith.constant 0 : i32
    %c0_i32_0 = arith.constant 0 : i32
    %c0_i32_1 = arith.constant 0 : i32
    return %c0_i32, %c0_i32_0 : i32, i32
  }
  func.func @transform_3(%arg0: i32, %arg1: i32) -> (i32, i32) {
    %c0_i32 = arith.constant 0 : i32
    %c0_i32_0 = arith.constant 0 : i32
    %c0_i32_1 = arith.constant 0 : i32
    return %c0_i32, %c0_i32_0 : i32, i32
  }
  func.func @transform_4(%arg0: i32, %arg1: i32) -> (i32, i32) {
    %c0_i32 = arith.constant 0 : i32
    %c0_i32_0 = arith.constant 0 : i32
    %c0_i32_1 = arith.constant 0 : i32
    return %c0_i32, %c0_i32_0 : i32, i32
  }
  func.func @transform_5(%arg0: i32, %arg1: i32) -> (i32, i32) {
    %c0_i32 = arith.constant 0 : i32
    %c0_i32_0 = arith.constant 0 : i32
    %c0_i32_1 = arith.constant 0 : i32
    return %c0_i32, %c0_i32_0 : i32, i32
  }
  func.func @transform_6(%arg0: i32, %arg1: i32) -> (i32, i32) {
    %c0_i32 = arith.constant 0 : i32
    %c0_i32_0 = arith.constant 0 : i32
    %c0_i32_1 = arith.constant 0 : i32
    return %c0_i32, %c0_i32_0 : i32, i32
  }
  func.func @transform_7(%arg0: i32, %arg1: i32) -> (i32, i32) {
    %c0_i32 = arith.constant 0 : i32
    %c0_i32_0 = arith.constant 0 : i32
    return %arg0, %c0_i32 : i32, i32
  }
}

module attributes {stable_mosaic.version = 11 : i64} {
  func.func @mlp_kernel(%arg0: i32, %arg1: i32, %arg2: memref<8x1024xf32, #tpu.memory_space<vmem>>, %arg3: memref<1024x128xf32, #tpu.memory_space<vmem>>, %arg4: memref<1x128xf32, #tpu.memory_space<vmem>>, %arg5: memref<128x128xf32, #tpu.memory_space<vmem>>, %arg6: memref<1x128xf32, #tpu.memory_space<vmem>>, %arg7: memref<128x128xf32, #tpu.memory_space<vmem>>, %arg8: memref<1x128xf32, #tpu.memory_space<vmem>>, %arg9: memref<8x128xf32, #tpu.memory_space<vmem>>, %arg10: memref<8x128xf32, #tpu.memory_space<vmem>>) attributes {dimension_semantics = [#tpu.dimension_semantics<parallel>, #tpu.dimension_semantics<arbitrary>], iteration_bounds = array<i64: 1, 1>, scalar_prefetch = 0 : i64, scratch_operands = 1 : i64, tpu.core_type = #tpu.core_type<tc>, window_params = [{transform_indices = @transform_0, window_bounds = array<i64: 8, 1024>}, {transform_indices = @transform_1, window_bounds = array<i64: 1024, 128>}, {pipeline_mode = #tpu.pipeline_mode<synchronous>, transform_indices = @transform_2, window_bounds = array<i64: 1, 128>}, {pipeline_mode = #tpu.pipeline_mode<synchronous>, transform_indices = @transform_3, window_bounds = array<i64: 128, 128>}, {pipeline_mode = #tpu.pipeline_mode<synchronous>, transform_indices = @transform_4, window_bounds = array<i64: 1, 128>}, {pipeline_mode = #tpu.pipeline_mode<synchronous>, transform_indices = @transform_5, window_bounds = array<i64: 128, 128>}, {pipeline_mode = #tpu.pipeline_mode<synchronous>, transform_indices = @transform_6, window_bounds = array<i64: 1, 128>}, {transform_indices = @transform_7, window_bounds = array<i64: 8, 128>}]} {
    %c0_i32 = arith.constant 0 : i32
    %0 = arith.cmpi eq, %arg1, %c0_i32 : i32
    %1 = arith.extui %0 : i1 to i32
    %c0_i32_0 = arith.constant 0 : i32
    %2 = arith.cmpi ne, %1, %c0_i32_0 : i32
    scf.if %2 {
      %cst_10 = arith.constant 0.000000e+00 : f32
      %12 = vector.broadcast %cst_10 : f32 to vector<8x128xf32>
      %c0_11 = arith.constant 0 : index
      %c0_12 = arith.constant 0 : index
      %13 = vector.load %arg10[%c0_11, %c0_12] : memref<8x128xf32, #tpu.memory_space<vmem>>, vector<8x128xf32>
      tpu.vector_store %arg10[%c0_11, %c0_12], %12 {strides = array<i32>} : memref<8x128xf32, #tpu.memory_space<vmem>>, vector<8x128xf32>,
    } else {
    }
    %c0 = arith.constant 0 : index
    %c0_1 = arith.constant 0 : index
    %3 = vector.load %arg10[%c0, %c0_1] : memref<8x128xf32, #tpu.memory_space<vmem>>, vector<8x128xf32>
    %c0_2 = arith.constant 0 : index
    %c0_3 = arith.constant 0 : index
    %4 = vector.load %arg2[%c0_2, %c0_3] : memref<8x1024xf32, #tpu.memory_space<vmem>>, vector<8x1024xf32>
    %c0_4 = arith.constant 0 : index
    %c0_5 = arith.constant 0 : index
    %5 = vector.load %arg3[%c0_4, %c0_5] : memref<1024x128xf32, #tpu.memory_space<vmem>>, vector<1024x128xf32>
    %cst = arith.constant dense<0.000000e+00> : vector<8x128xf32>
    %6 = tpu.matmul %4, %5, %cst {dimension_numbers = #tpu.dot_dimension_numbers<[1], [0], [0], [1], [0, 0, 1, 1], [], []>} : vector<8x1024xf32>, vector<1024x128xf32>, vector<8x128xf32> -> vector<8x128xf32>
    %7 = arith.addf %3, %6 : vector<8x128xf32>
    %c0_6 = arith.constant 0 : index
    %c0_7 = arith.constant 0 : index
    %8 = vector.load %arg10[%c0_6, %c0_7] : memref<8x128xf32, #tpu.memory_space<vmem>>, vector<8x128xf32>
    tpu.vector_store %arg10[%c0_6, %c0_7], %7 {strides = array<i32>} : memref<8x128xf32, #tpu.memory_space<vmem>>, vector<8x128xf32>,
    %c0_i32_8 = arith.constant 0 : i32
    %9 = arith.cmpi eq, %arg1, %c0_i32_8 : i32
    %10 = arith.extui %9 : i1 to i32
    %c0_i32_9 = arith.constant 0 : i32
    %11 = arith.cmpi ne, %10, %c0_i32_9 : i32
    scf.if %11 {
      %c0_10 = arith.constant 0 : index
      %c0_11 = arith.constant 0 : index
      %12 = vector.load %arg10[%c0_10, %c0_11] : memref<8x128xf32, #tpu.memory_space<vmem>>, vector<8x128xf32>
      %c0_12 = arith.constant 0 : index
      %c0_13 = arith.constant 0 : index
      %13 = vector.load %arg4[%c0_12, %c0_13] : memref<1x128xf32, #tpu.memory_space<vmem>>, vector<1x128xf32>
      %14 = vector.broadcast %13 : vector<1x128xf32> to vector<8x128xf32>
      %15 = arith.addf %12, %14 : vector<8x128xf32>
      %cst_14 = arith.constant 0.000000e+00 : f32
      %16 = vector.broadcast %cst_14 : f32 to vector<8x128xf32>
      %17 = arith.maximumf %15, %16 : vector<8x128xf32>
      %c0_15 = arith.constant 0 : index
      %c0_16 = arith.constant 0 : index
      %18 = vector.load %arg5[%c0_15, %c0_16] : memref<128x128xf32, #tpu.memory_space<vmem>>, vector<128x128xf32>
      %cst_17 = arith.constant dense<0.000000e+00> : vector<8x128xf32>
      %19 = tpu.matmul %17, %18, %cst_17 {dimension_numbers = #tpu.dot_dimension_numbers<[1], [0], [0], [1], [0, 0, 1, 1], [], []>} : vector<8x128xf32>, vector<128x128xf32>, vector<8x128xf32> -> vector<8x128xf32>
      %c0_18 = arith.constant 0 : index
      %c0_19 = arith.constant 0 : index
      %20 = vector.load %arg6[%c0_18, %c0_19] : memref<1x128xf32, #tpu.memory_space<vmem>>, vector<1x128xf32>
      %21 = vector.broadcast %20 : vector<1x128xf32> to vector<8x128xf32>
      %22 = arith.addf %19, %21 : vector<8x128xf32>
      %cst_20 = arith.constant 0.000000e+00 : f32
      %23 = vector.broadcast %cst_20 : f32 to vector<8x128xf32>
      %24 = arith.maximumf %22, %23 : vector<8x128xf32>
      %c0_21 = arith.constant 0 : index
      %c0_22 = arith.constant 0 : index
      %25 = vector.load %arg7[%c0_21, %c0_22] : memref<128x128xf32, #tpu.memory_space<vmem>>, vector<128x128xf32>
      %cst_23 = arith.constant dense<0.000000e+00> : vector<8x128xf32>
      %26 = tpu.matmul %24, %25, %cst_23 {dimension_numbers = #tpu.dot_dimension_numbers<[1], [0], [0], [1], [0, 0, 1, 1], [], []>} : vector<8x128xf32>, vector<128x128xf32>, vector<8x128xf32> -> vector<8x128xf32>
      %c0_24 = arith.constant 0 : index
      %c0_25 = arith.constant 0 : index
      %27 = vector.load %arg8[%c0_24, %c0_25] : memref<1x128xf32, #tpu.memory_space<vmem>>, vector<1x128xf32>
      %28 = vector.broadcast %27 : vector<1x128xf32> to vector<8x128xf32>
      %29 = arith.addf %26, %28 : vector<8x128xf32>
      %cst_26 = arith.constant 0.000000e+00 : f32
      %30 = vector.broadcast %cst_26 : f32 to vector<8x128xf32>
      %31 = arith.maximumf %29, %30 : vector<8x128xf32>
      %c0_27 = arith.constant 0 : index
      %c0_28 = arith.constant 0 : index
      %32 = vector.load %arg9[%c0_27, %c0_28] : memref<8x128xf32, #tpu.memory_space<vmem>>, vector<8x128xf32>
      tpu.vector_store %arg9[%c0_27, %c0_28], %31 {strides = array<i32>} : memref<8x128xf32, #tpu.memory_space<vmem>>, vector<8x128xf32>,
    } else {
    }
    return
  }
  func.func @transform_0(%arg0: i32, %arg1: i32) -> (i32, i32) {
    %c0_i32 = arith.constant 0 : i32
    return %arg0, %arg1 : i32, i32
  }
  func.func @transform_1(%arg0: i32, %arg1: i32) -> (i32, i32) {
    %c0_i32 = arith.constant 0 : i32
    %c0_i32_0 = arith.constant 0 : i32
    return %arg1, %c0_i32 : i32, i32
  }
  func.func @transform_2(%arg0: i32, %arg1: i32) -> (i32, i32) {
    %c0_i32 = arith.constant 0 : i32
    %c0_i32_0 = arith.constant 0 : i32
    %c0_i32_1 = arith.constant 0 : i32
    return %c0_i32, %c0_i32_0 : i32, i32
  }
  func.func @transform_3(%arg0: i32, %arg1: i32) -> (i32, i32) {
    %c0_i32 = arith.constant 0 : i32
    %c0_i32_0 = arith.constant 0 : i32
    %c0_i32_1 = arith.constant 0 : i32
    return %c0_i32, %c0_i32_0 : i32, i32
  }
  func.func @transform_4(%arg0: i32, %arg1: i32) -> (i32, i32) {
    %c0_i32 = arith.constant 0 : i32
    %c0_i32_0 = arith.constant 0 : i32
    %c0_i32_1 = arith.constant 0 : i32
    return %c0_i32, %c0_i32_0 : i32, i32
  }
  func.func @transform_5(%arg0: i32, %arg1: i32) -> (i32, i32) {
    %c0_i32 = arith.constant 0 : i32
    %c0_i32_0 = arith.constant 0 : i32
    %c0_i32_1 = arith.constant 0 : i32
    return %c0_i32, %c0_i32_0 : i32, i32
  }
  func.func @transform_6(%arg0: i32, %arg1: i32) -> (i32, i32) {
    %c0_i32 = arith.constant 0 : i32
    %c0_i32_0 = arith.constant 0 : i32
    %c0_i32_1 = arith.constant 0 : i32
    return %c0_i32, %c0_i32_0 : i32, i32
  }
  func.func @transform_7(%arg0: i32, %arg1: i32) -> (i32, i32) {
    %c0_i32 = arith.constant 0 : i32
    %c0_i32_0 = arith.constant 0 : i32
    return %arg0, %c0_i32 : i32, i32
  }
}

</mosaic_0001>

<llo_original>
// kernel: net_forward.1
$region0: #{net_forward.1}
  #allocation0 [shape = 'u32[]', space=smem, size = 0x4, offset = 0x4, fixed_abs, tag = 'smem constant byte address 0x4 - core index']
  #allocation1 [shape = 'u32[72,128]{1,0:T(1,128)}', space=vmem, size = 0x9000, scoped, tag = 'internal scratch']
  #allocation2 [shape = 'f32[8,128]{1,0:T(8,128)}', space=vmem, size = 0x1000, scoped, tag = 'scratch operand']
  %s0 = inlined_call_operand.vmem [shape: f32[8,1024], index: 0, kind: input, shape index: {}]
  %s1 = inlined_call_operand.hbm [shape: f32[1024,128], index: 1, kind: input, shape index: {}]
  %s2 = inlined_call_operand.vmem [shape: f32[1,128], index: 2, kind: input, shape index: {}]
  %s3 = inlined_call_operand.vmem [shape: f32[128,128], index: 3, kind: input, shape index: {}]
  %s4 = inlined_call_operand.vmem [shape: f32[1,128], index: 4, kind: input, shape index: {}]
  %s5 = inlined_call_operand.hbm [shape: f32[128,128], index: 5, kind: input, shape index: {}]
  %s6 = inlined_call_operand.vmem [shape: f32[1,128], index: 6, kind: input, shape index: {}]
  %s7 = inlined_call_operand.vmem [shape: f32[8,128], index: 7, kind: output, shape index: {}]
  %s8 = sld [smem:[#allocation0]]
  $region54: #{net_forward.1} parent=0
    _
  %s10 = ssub.s32 1, %s8
  %s11 = scalar_select 0, %s10, %s8
  $region1: #{net_forward.1} parent=0
    #allocation3 [shape = 'u8[524288]{0}', space=vmem, size = 0x80000, scoped, tag = 'input window, operand 1, single buffered']
    #allocation4 [shape = 's32[1]{0}', space=sflag, size = 0x4, scoped, tag = 'scoped memory for net_forward.1']
    #allocation5 [shape = 'u8[65536]{0}', space=vmem, size = 0x10000, scoped, tag = 'input window, operand 5, single buffered']
    #allocation6 [shape = 's32[1]{0}', space=sflag, size = 0x4, scoped, tag = 'scoped memory for net_forward.1']
    %12 = vsyncpa [#allocation4], 0
    %13 = vsyncpa [#allocation6], 0
    // Predicated region
    $region2: #{net_forward.1} parent=1 // pred_check
      _
    $region3: #{net_forward.1} parent=1 // pred_check_branch
      %15 = sbr.rel (0) target = $region5
    $region4: #{net_forward.1} parent=1 // pred_region
      _
    $region5: #{net_forward.1} parent=1 // pred_fallthru
      _
    // Predicated region
    $region6: #{net_forward.1} parent=1 // pred_check
      _
    $region7: #{net_forward.1} parent=1 // pred_check_branch
      %17 = sbr.rel (0) target = $region9
    $region8: #{net_forward.1} parent=1 // pred_region
      %19 = vsyncadd [#allocation4], 0
      %s20 = sshll.u32 %s1, 4
      %s21 = int_to_ptr.hbm [resolvable:$true] %s20
      %s22 = sshll.u32 [#allocation3], 4
      %s23 = int_to_ptr.vmem [resolvable:$true] %s22
      %28 = dma.hbm_to_vmem [thread:$0]  %s21, 16384, %s23, [#allocation4], 128, 128, 8
    $region9: #{net_forward.1} parent=1 // pred_fallthru
      _
    // Predicated region
    $region10: #{net_forward.1} parent=1 // pred_check
      _
    $region11: #{net_forward.1} parent=1 // pred_check_branch
      %30 = sbr.rel (0) target = $region13
    $region12: #{net_forward.1} parent=1 // pred_region
      _
    $region13: #{net_forward.1} parent=1 // pred_fallthru
      _
    // Predicated region
    $region14: #{net_forward.1} parent=1 // pred_check
      _
    $region15: #{net_forward.1} parent=1 // pred_check_branch
      %32 = sbr.rel (0) target = $region17
    $region16: #{net_forward.1} parent=1 // pred_region
      _
    $region17: #{net_forward.1} parent=1 // pred_fallthru
      _
    // Predicated region
    $region18: #{net_forward.1} parent=1 // pred_check
      _
    $region19: #{net_forward.1} parent=1 // pred_check_branch
      %34 = sbr.rel (0) target = $region21
    $region20: #{net_forward.1} parent=1 // pred_region
      _
    $region21: #{net_forward.1} parent=1 // pred_fallthru
      _
    // Predicated region
    $region22: #{net_forward.1} parent=1 // pred_check
      _
    $region23: #{net_forward.1} parent=1 // pred_check_branch
      %36 = sbr.rel (0) target = $region25
    $region24: #{net_forward.1} parent=1 // pred_region
      %38 = vsyncadd [#allocation6], 0
      %s39 = sshll.u32 %s5, 4
      %s40 = int_to_ptr.hbm [resolvable:$true] %s39
      %s41 = sshll.u32 [#allocation5], 4
      %s42 = int_to_ptr.vmem [resolvable:$true] %s41
      %47 = dma.hbm_to_vmem [thread:$0]  %s40, 2048, %s42, [#allocation6], 128, 128, 8
    $region25: #{net_forward.1} parent=1 // pred_fallthru
      _
    // Predicated region
    $region26: #{net_forward.1} parent=1 // pred_check
      _
    $region27: #{net_forward.1} parent=1 // pred_check_branch
      %49 = sbr.rel (0) target = $region29
    $region28: #{net_forward.1} parent=1 // pred_region
      _
    $region29: #{net_forward.1} parent=1 // pred_fallthru
      _
    // Predicated region
    $region30: #{net_forward.1} parent=1 // pred_check
      _
    $region31: #{net_forward.1} parent=1 // pred_check_branch
      %51 = sbr.rel (0) target = $region33
    $region32: #{net_forward.1} parent=1 // pred_region
      %53 = dma.done [#allocation4], 16384
    $region33: #{net_forward.1} parent=1 // pred_fallthru
      _
    // Predicated region
    $region34: #{net_forward.1} parent=1 // pred_check
      _
    $region35: #{net_forward.1} parent=1 // pred_check_branch
      %55 = sbr.rel (0) target = $region37
    $region36: #{net_forward.1} parent=1 // pred_region
      %57 = dma.done [#allocation6], 2048
    $region37: #{net_forward.1} parent=1 // pred_fallthru
      _
    %p58 = scmp.eq.s32.totalorder 0, 0
    // Predicated region
    $region38: #{net_forward.1} parent=1 // pred_check
      %p59 = pneg %p58
    $region39: #{net_forward.1} parent=1 // pred_check_branch
      %61 = sbr.rel (%p59) target = $region41
    $region40: #{net_forward.1} parent=1 // pred_region
      %62 = vst [vmem:[#allocation2] sm:$0xff] 0.0
    $region41: #{net_forward.1} parent=1 // pred_fallthru
      _
    %v63 = vld [vmem:[#allocation2] sm:$0xff]
    %v64 = vld [vmem:[%s0] sm:$0xff]
    %v65 = vld [vmem:[%s0 + $0x8] sm:$0xff]
    %v66 = vld [vmem:[%s0 + $0x10] sm:$0xff]
    %v67 = vld [vmem:[%s0 + $0x18] sm:$0xff]
    %v68 = vld [vmem:[%s0 + $0x20] sm:$0xff]
    %v69 = vld [vmem:[%s0 + $0x28] sm:$0xff]
    %v70 = vld [vmem:[%s0 + $0x30] sm:$0xff]
    %v71 = vld [vmem:[%s0 + $0x38] sm:$0xff]
    %v72 = vld [vmem:[#allocation3] sm:$0xff]
    %v73 = vld [vmem:[#allocation3 + $0x8] sm:$0xff]
    %v74 = vld [vmem:[#allocation3 + $0x10] sm:$0xff]
    %v75 = vld [vmem:[#allocation3 + $0x18] sm:$0xff]
    %v76 = vld [vmem:[#allocation3 + $0x20] sm:$0xff]
    %v77 = vld [vmem:[#allocation3 + $0x28] sm:$0xff]
    %v78 = vld [vmem:[#allocation3 + $0x30] sm:$0xff]
    %v79 = vld [vmem:[#allocation3 + $0x38] sm:$0xff]
    %v80 = vld [vmem:[#allocation3 + $0x40] sm:$0xff]
    %v81 = vld [vmem:[#allocation3 + $0x48] sm:$0xff]
    %v82 = vld [vmem:[#allocation3 + $0x50] sm:$0xff]
    %v83 = vld [vmem:[#allocation3 + $0x58] sm:$0xff]
    %v84 = vld [vmem:[#allocation3 + $0x60] sm:$0xff]
    %v85 = vld [vmem:[#allocation3 + $0x68] sm:$0xff]
    %v86 = vld [vmem:[#allocation3 + $0x70] sm:$0xff]
    %v87 = vld [vmem:[#allocation3 + $0x78] sm:$0xff]
    %v88 = vld [vmem:[#allocation3 + $0x80] sm:$0xff]
    %v89 = vld [vmem:[#allocation3 + $0x88] sm:$0xff]
    %v90 = vld [vmem:[#allocation3 + $0x90] sm:$0xff]
    %v91 = vld [vmem:[#allocation3 + $0x98] sm:$0xff]
    %v92 = vld [vmem:[#allocation3 + $0xa0] sm:$0xff]
    %v93 = vld [vmem:[#allocation3 + $0xa8] sm:$0xff]
    %v94 = vld [vmem:[#allocation3 + $0xb0] sm:$0xff]
    %v95 = vld [vmem:[#allocation3 + $0xb8] sm:$0xff]
    %v96 = vld [vmem:[#allocation3 + $0xc0] sm:$0xff]
    %v97 = vld [vmem:[#allocation3 + $0xc8] sm:$0xff]
    %v98 = vld [vmem:[#allocation3 + $0xd0] sm:$0xff]
    %v99 = vld [vmem:[#allocation3 + $0xd8] sm:$0xff]
    %v100 = vld [vmem:[#allocation3 + $0xe0] sm:$0xff]
    %v101 = vld [vmem:[#allocation3 + $0xe8] sm:$0xff]
    %v102 = vld [vmem:[#allocation3 + $0xf0] sm:$0xff]
    %v103 = vld [vmem:[#allocation3 + $0xf8] sm:$0xff]
    %v104 = vld [vmem:[#allocation3 + $0x100] sm:$0xff]
    %v105 = vld [vmem:[#allocation3 + $0x108] sm:$0xff]
    %v106 = vld [vmem:[#allocation3 + $0x110] sm:$0xff]
    %v107 = vld [vmem:[#allocation3 + $0x118] sm:$0xff]
    %v108 = vld [vmem:[#allocation3 + $0x120] sm:$0xff]
    %v109 = vld [vmem:[#allocation3 + $0x128] sm:$0xff]
    %v110 = vld [vmem:[#allocation3 + $0x130] sm:$0xff]
    %v111 = vld [vmem:[#allocation3 + $0x138] sm:$0xff]
    %v112 = vld [vmem:[#allocation3 + $0x140] sm:$0xff]
    %v113 = vld [vmem:[#allocation3 + $0x148] sm:$0xff]
    %v114 = vld [vmem:[#allocation3 + $0x150] sm:$0xff]
    %v115 = vld [vmem:[#allocation3 + $0x158] sm:$0xff]
    %v116 = vld [vmem:[#allocation3 + $0x160] sm:$0xff]
    %v117 = vld [vmem:[#allocation3 + $0x168] sm:$0xff]
    %v118 = vld [vmem:[#allocation3 + $0x170] sm:$0xff]
    %v119 = vld [vmem:[#allocation3 + $0x178] sm:$0xff]
    %v120 = vld [vmem:[#allocation3 + $0x180] sm:$0xff]
    %v121 = vld [vmem:[#allocation3 + $0x188] sm:$0xff]
    %v122 = vld [vmem:[#allocation3 + $0x190] sm:$0xff]
    %v123 = vld [vmem:[#allocation3 + $0x198] sm:$0xff]
    %v124 = vld [vmem:[#allocation3 + $0x1a0] sm:$0xff]
    %v125 = vld [vmem:[#allocation3 + $0x1a8] sm:$0xff]
    %v126 = vld [vmem:[#allocation3 + $0x1b0] sm:$0xff]
    %v127 = vld [vmem:[#allocation3 + $0x1b8] sm:$0xff]
    %v128 = vld [vmem:[#allocation3 + $0x1c0] sm:$0xff]
    %v129 = vld [vmem:[#allocation3 + $0x1c8] sm:$0xff]
    %v130 = vld [vmem:[#allocation3 + $0x1d0] sm:$0xff]
    %v131 = vld [vmem:[#allocation3 + $0x1d8] sm:$0xff]
    %v132 = vld [vmem:[#allocation3 + $0x1e0] sm:$0xff]
    %v133 = vld [vmem:[#allocation3 + $0x1e8] sm:$0xff]
    %v134 = vld [vmem:[#allocation3 + $0x1f0] sm:$0xff]
    %v135 = vld [vmem:[#allocation3 + $0x1f8] sm:$0xff]
    %v136 = vld [vmem:[#allocation3 + $0x200] sm:$0xff]
    %v137 = vld [vmem:[#allocation3 + $0x208] sm:$0xff]
    %v138 = vld [vmem:[#allocation3 + $0x210] sm:$0xff]
    %v139 = vld [vmem:[#allocation3 + $0x218] sm:$0xff]
    %v140 = vld [vmem:[#allocation3 + $0x220] sm:$0xff]
    %v141 = vld [vmem:[#allocation3 + $0x228] sm:$0xff]
    %v142 = vld [vmem:[#allocation3 + $0x230] sm:$0xff]
    %v143 = vld [vmem:[#allocation3 + $0x238] sm:$0xff]
    %v144 = vld [vmem:[#allocation3 + $0x240] sm:$0xff]
    %v145 = vld [vmem:[#allocation3 + $0x248] sm:$0xff]
    %v146 = vld [vmem:[#allocation3 + $0x250] sm:$0xff]
    %v147 = vld [vmem:[#allocation3 + $0x258] sm:$0xff]
    %v148 = vld [vmem:[#allocation3 + $0x260] sm:$0xff]
    %v149 = vld [vmem:[#allocation3 + $0x268] sm:$0xff]
    %v150 = vld [vmem:[#allocation3 + $0x270] sm:$0xff]
    %v151 = vld [vmem:[#allocation3 + $0x278] sm:$0xff]
    %v152 = vld [vmem:[#allocation3 + $0x280] sm:$0xff]
    %v153 = vld [vmem:[#allocation3 + $0x288] sm:$0xff]
    %v154 = vld [vmem:[#allocation3 + $0x290] sm:$0xff]
    %v155 = vld [vmem:[#allocation3 + $0x298] sm:$0xff]
    %v156 = vld [vmem:[#allocation3 + $0x2a0] sm:$0xff]
    %v157 = vld [vmem:[#allocation3 + $0x2a8] sm:$0xff]
    %v158 = vld [vmem:[#allocation3 + $0x2b0] sm:$0xff]
    %v159 = vld [vmem:[#allocation3 + $0x2b8] sm:$0xff]
    %v160 = vld [vmem:[#allocation3 + $0x2c0] sm:$0xff]
    %v161 = vld [vmem:[#allocation3 + $0x2c8] sm:$0xff]
    %v162 = vld [vmem:[#allocation3 + $0x2d0] sm:$0xff]
    %v163 = vld [vmem:[#allocation3 + $0x2d8] sm:$0xff]
    %v164 = vld [vmem:[#allocation3 + $0x2e0] sm:$0xff]
    %v165 = vld [vmem:[#allocation3 + $0x2e8] sm:$0xff]
    %v166 = vld [vmem:[#allocation3 + $0x2f0] sm:$0xff]
    %v167 = vld [vmem:[#allocation3 + $0x2f8] sm:$0xff]
    %v168 = vld [vmem:[#allocation3 + $0x300] sm:$0xff]
    %v169 = vld [vmem:[#allocation3 + $0x308] sm:$0xff]
    %v170 = vld [vmem:[#allocation3 + $0x310] sm:$0xff]
    %v171 = vld [vmem:[#allocation3 + $0x318] sm:$0xff]
    %v172 = vld [vmem:[#allocation3 + $0x320] sm:$0xff]
    %v173 = vld [vmem:[#allocation3 + $0x328] sm:$0xff]
    %v174 = vld [vmem:[#allocation3 + $0x330] sm:$0xff]
    %v175 = vld [vmem:[#allocation3 + $0x338] sm:$0xff]
    %v176 = vld [vmem:[#allocation3 + $0x340] sm:$0xff]
    %v177 = vld [vmem:[#allocation3 + $0x348] sm:$0xff]
    %v178 = vld [vmem:[#allocation3 + $0x350] sm:$0xff]
    %v179 = vld [vmem:[#allocation3 + $0x358] sm:$0xff]
    %v180 = vld [vmem:[#allocation3 + $0x360] sm:$0xff]
    %v181 = vld [vmem:[#allocation3 + $0x368] sm:$0xff]
    %v182 = vld [vmem:[#allocation3 + $0x370] sm:$0xff]
    %v183 = vld [vmem:[#allocation3 + $0x378] sm:$0xff]
    %v184 = vld [vmem:[#allocation3 + $0x380] sm:$0xff]
    %v185 = vld [vmem:[#allocation3 + $0x388] sm:$0xff]
    %v186 = vld [vmem:[#allocation3 + $0x390] sm:$0xff]
    %v187 = vld [vmem:[#allocation3 + $0x398] sm:$0xff]
    %v188 = vld [vmem:[#allocation3 + $0x3a0] sm:$0xff]
    %v189 = vld [vmem:[#allocation3 + $0x3a8] sm:$0xff]
    %v190 = vld [vmem:[#allocation3 + $0x3b0] sm:$0xff]
    %v191 = vld [vmem:[#allocation3 + $0x3b8] sm:$0xff]
    %v192 = vld [vmem:[#allocation3 + $0x3c0] sm:$0xff]
    %v193 = vld [vmem:[#allocation3 + $0x3c8] sm:$0xff]
    %v194 = vld [vmem:[#allocation3 + $0x3d0] sm:$0xff]
    %v195 = vld [vmem:[#allocation3 + $0x3d8] sm:$0xff]
    %v196 = vld [vmem:[#allocation3 + $0x3e0] sm:$0xff]
    %v197 = vld [vmem:[#allocation3 + $0x3e8] sm:$0xff]
    %v198 = vld [vmem:[#allocation3 + $0x3f0] sm:$0xff]
    %v199 = vld [vmem:[#allocation3 + $0x3f8] sm:$0xff]
    %200 = vmatpush.msra.mxu0 %v87
    %201 = vmatpush.msra.mxu0 %v86
    %202 = vmatpush.msra.mxu0 %v85
    %203 = vmatpush.msra.mxu0 %v84
    %204 = vmatpush.msra.mxu0 %v83
    %205 = vmatpush.msra.mxu0 %v82
    %206 = vmatpush.msra.mxu0 %v81
    %207 = vmatpush.msra.mxu0 %v80
    %208 = vmatpush.msra.mxu0 %v79
    %209 = vmatpush.msra.mxu0 %v78
    %210 = vmatpush.msra.mxu0 %v77
    %211 = vmatpush.msra.mxu0 %v76
    %212 = vmatpush.msra.mxu0 %v75
    %213 = vmatpush.msra.mxu0 %v74
    %214 = vmatpush.msra.mxu0 %v73
    %215 = vmatpush.msra.mxu0 %v72
    %216 = vmatmul.f32.gmra.mxu0 %v64
    %v217 = vpop.f32.mrf.mxu0
    %v218 = vadd.f32 0.0, %v217
    %219 = vdwg.mxu0
    %220 = vmatpush.msra.mxu0 %v103
    %221 = vmatpush.msra.mxu0 %v102
    %222 = vmatpush.msra.mxu0 %v101
    %223 = vmatpush.msra.mxu0 %v100
    %224 = vmatpush.msra.mxu0 %v99
    %225 = vmatpush.msra.mxu0 %v98
    %226 = vmatpush.msra.mxu0 %v97
    %227 = vmatpush.msra.mxu0 %v96
    %228 = vmatpush.msra.mxu0 %v95
    %229 = vmatpush.msra.mxu0 %v94
    %230 = vmatpush.msra.mxu0 %v93
    %231 = vmatpush.msra.mxu0 %v92
    %232 = vmatpush.msra.mxu0 %v91
    %233 = vmatpush.msra.mxu0 %v90
    %234 = vmatpush.msra.mxu0 %v89
    %235 = vmatpush.msra.mxu0 %v88
    %236 = vmatmul.f32.gmra.mxu0 %v65
    %v237 = vpop.f32.mrf.mxu0
    %v238 = vadd.f32 %v218, %v237
    %239 = vdwg.mxu0
    %240 = vmatpush.msra.mxu0 %v119
    %241 = vmatpush.msra.mxu0 %v118
    %242 = vmatpush.msra.mxu0 %v117
    %243 = vmatpush.msra.mxu0 %v116
    %244 = vmatpush.msra.mxu0 %v115
    %245 = vmatpush.msra.mxu0 %v114
    %246 = vmatpush.msra.mxu0 %v113
    %247 = vmatpush.msra.mxu0 %v112
    %248 = vmatpush.msra.mxu0 %v111
    %249 = vmatpush.msra.mxu0 %v110
    %250 = vmatpush.msra.mxu0 %v109
    %251 = vmatpush.msra.mxu0 %v108
    %252 = vmatpush.msra.mxu0 %v107
    %253 = vmatpush.msra.mxu0 %v106
    %254 = vmatpush.msra.mxu0 %v105
    %255 = vmatpush.msra.mxu0 %v104
    %256 = vmatmul.f32.gmra.mxu0 %v66
    %v257 = vpop.f32.mrf.mxu0
    %v258 = vadd.f32 %v238, %v257
    %259 = vdwg.mxu0
    %260 = vmatpush.msra.mxu0 %v135
    %261 = vmatpush.msra.mxu0 %v134
    %262 = vmatpush.msra.mxu0 %v133
    %263 = vmatpush.msra.mxu0 %v132
    %264 = vmatpush.msra.mxu0 %v131
    %265 = vmatpush.msra.mxu0 %v130
    %266 = vmatpush.msra.mxu0 %v129
    %267 = vmatpush.msra.mxu0 %v128
    %268 = vmatpush.msra.mxu0 %v127
    %269 = vmatpush.msra.mxu0 %v126
    %270 = vmatpush.msra.mxu0 %v125
    %271 = vmatpush.msra.mxu0 %v124
    %272 = vmatpush.msra.mxu0 %v123
    %273 = vmatpush.msra.mxu0 %v122
    %274 = vmatpush.msra.mxu0 %v121
    %275 = vmatpush.msra.mxu0 %v120
    %276 = vmatmul.f32.gmra.mxu0 %v67
    %v277 = vpop.f32.mrf.mxu0
    %v278 = vadd.f32 %v258, %v277
    %279 = vdwg.mxu0
    %280 = vmatpush.msra.mxu0 %v151
    %281 = vmatpush.msra.mxu0 %v150
    %282 = vmatpush.msra.mxu0 %v149
    %283 = vmatpush.msra.mxu0 %v148
    %284 = vmatpush.msra.mxu0 %v147
    %285 = vmatpush.msra.mxu0 %v146
    %286 = vmatpush.msra.mxu0 %v145
    %287 = vmatpush.msra.mxu0 %v144
    %288 = vmatpush.msra.mxu0 %v143
    %289 = vmatpush.msra.mxu0 %v142
    %290 = vmatpush.msra.mxu0 %v141
    %291 = vmatpush.msra.mxu0 %v140
    %292 = vmatpush.msra.mxu0 %v139
    %293 = vmatpush.msra.mxu0 %v138
    %294 = vmatpush.msra.mxu0 %v137
    %295 = vmatpush.msra.mxu0 %v136
    %296 = vmatmul.f32.gmra.mxu0 %v68
    %v297 = vpop.f32.mrf.mxu0
    %v298 = vadd.f32 %v278, %v297
    %299 = vdwg.mxu0
    %300 = vmatpush.msra.mxu0 %v167
    %301 = vmatpush.msra.mxu0 %v166
    %302 = vmatpush.msra.mxu0 %v165
    %303 = vmatpush.msra.mxu0 %v164
    %304 = vmatpush.msra.mxu0 %v163
    %305 = vmatpush.msra.mxu0 %v162
    %306 = vmatpush.msra.mxu0 %v161
    %307 = vmatpush.msra.mxu0 %v160
    %308 = vmatpush.msra.mxu0 %v159
    %309 = vmatpush.msra.mxu0 %v158
    %310 = vmatpush.msra.mxu0 %v157
    %311 = vmatpush.msra.mxu0 %v156
    %312 = vmatpush.msra.mxu0 %v155
    %313 = vmatpush.msra.mxu0 %v154
    %314 = vmatpush.msra.mxu0 %v153
    %315 = vmatpush.msra.mxu0 %v152
    %316 = vmatmul.f32.gmra.mxu0 %v69
    %v317 = vpop.f32.mrf.mxu0
    %v318 = vadd.f32 %v298, %v317
    %319 = vdwg.mxu0
    %320 = vmatpush.msra.mxu0 %v183
    %321 = vmatpush.msra.mxu0 %v182
    %322 = vmatpush.msra.mxu0 %v181
    %323 = vmatpush.msra.mxu0 %v180
    %324 = vmatpush.msra.mxu0 %v179
    %325 = vmatpush.msra.mxu0 %v178
    %326 = vmatpush.msra.mxu0 %v177
    %327 = vmatpush.msra.mxu0 %v176
    %328 = vmatpush.msra.mxu0 %v175
    %329 = vmatpush.msra.mxu0 %v174
    %330 = vmatpush.msra.mxu0 %v173
    %331 = vmatpush.msra.mxu0 %v172
    %332 = vmatpush.msra.mxu0 %v171
    %333 = vmatpush.msra.mxu0 %v170
    %334 = vmatpush.msra.mxu0 %v169
    %335 = vmatpush.msra.mxu0 %v168
    %336 = vmatmul.f32.gmra.mxu0 %v70
    %v337 = vpop.f32.mrf.mxu0
    %v338 = vadd.f32 %v318, %v337
    %339 = vdwg.mxu0
    %340 = vmatpush.msra.mxu0 %v199
    %341 = vmatpush.msra.mxu0 %v198
    %342 = vmatpush.msra.mxu0 %v197
    %343 = vmatpush.msra.mxu0 %v196
    %344 = vmatpush.msra.mxu0 %v195
    %345 = vmatpush.msra.mxu0 %v194
    %346 = vmatpush.msra.mxu0 %v193
    %347 = vmatpush.msra.mxu0 %v192
    %348 = vmatpush.msra.mxu0 %v191
    %349 = vmatpush.msra.mxu0 %v190
    %350 = vmatpush.msra.mxu0 %v189
    %351 = vmatpush.msra.mxu0 %v188
    %352 = vmatpush.msra.mxu0 %v187
    %353 = vmatpush.msra.mxu0 %v186
    %354 = vmatpush.msra.mxu0 %v185
    %355 = vmatpush.msra.mxu0 %v184
    %356 = vmatmul.f32.gmra.mxu0 %v71
    %v357 = vpop.f32.mrf.mxu0
    %v358 = vadd.f32 %v338, %v357
    %359 = vdwg.mxu0
    %v360 = vadd.f32 %v63, %v358
    %361 = vst [vmem:[#allocation2] sm:$0xff] %v360
    // Predicated region
    $region42: #{net_forward.1} parent=1 // pred_check
      %p362 = pneg %p58
    $region43: #{net_forward.1} parent=1 // pred_check_branch
      %364 = sbr.rel (%p362) target = $region45
    $region44: #{net_forward.1} parent=1 // pred_region
      %v365 = vld [vmem:[#allocation2] sm:$0xff]
      %v366 = vld [vmem:[%s2] sm:$0x1]
      %v368 = vperm.slane %v366, 0
      %v370 = vadd.f32 %v365, %v368
      %v371 = vmax.f32 %v370, 0.0
      %v372 = vld [vmem:[%s3] sm:$0xff]
      %v373 = vld [vmem:[%s3 + $0x8] sm:$0xff]
      %v374 = vld [vmem:[%s3 + $0x10] sm:$0xff]
      %v375 = vld [vmem:[%s3 + $0x18] sm:$0xff]
      %v376 = vld [vmem:[%s3 + $0x20] sm:$0xff]
      %v377 = vld [vmem:[%s3 + $0x28] sm:$0xff]
      %v378 = vld [vmem:[%s3 + $0x30] sm:$0xff]
      %v379 = vld [vmem:[%s3 + $0x38] sm:$0xff]
      %v380 = vld [vmem:[%s3 + $0x40] sm:$0xff]
      %v381 = vld [vmem:[%s3 + $0x48] sm:$0xff]
      %v382 = vld [vmem:[%s3 + $0x50] sm:$0xff]
      %v383 = vld [vmem:[%s3 + $0x58] sm:$0xff]
      %v384 = vld [vmem:[%s3 + $0x60] sm:$0xff]
      %v385 = vld [vmem:[%s3 + $0x68] sm:$0xff]
      %v386 = vld [vmem:[%s3 + $0x70] sm:$0xff]
      %v387 = vld [vmem:[%s3 + $0x78] sm:$0xff]
      %v388 = vld [vmem:[%s4] sm:$0x1]
      %v390 = vperm.slane %v388, 0
      %392 = vmatpush.msra.mxu0 %v387
      %393 = vmatpush.msra.mxu0 %v386
      %394 = vmatpush.msra.mxu0 %v385
      %395 = vmatpush.msra.mxu0 %v384
      %396 = vmatpush.msra.mxu0 %v383
      %397 = vmatpush.msra.mxu0 %v382
      %398 = vmatpush.msra.mxu0 %v381
      %399 = vmatpush.msra.mxu0 %v380
      %400 = vmatpush.msra.mxu0 %v379
      %401 = vmatpush.msra.mxu0 %v378
      %402 = vmatpush.msra.mxu0 %v377
      %403 = vmatpush.msra.mxu0 %v376
      %404 = vmatpush.msra.mxu0 %v375
      %405 = vmatpush.msra.mxu0 %v374
      %406 = vmatpush.msra.mxu0 %v373
      %407 = vmatpush.msra.mxu0 %v372
      %408 = vmatmul.f32.gmra.mxu0 %v371
      %v409 = vpop.f32.mrf.mxu0
      %v410 = vadd.f32 %v390, %v409
      %411 = vdwg.mxu0
      %v412 = vmax.f32 %v410, 0.0
      %v413 = vld [vmem:[#allocation5] sm:$0xff]
      %v414 = vld [vmem:[#allocation5 + $0x8] sm:$0xff]
      %v415 = vld [vmem:[#allocation5 + $0x10] sm:$0xff]
      %v416 = vld [vmem:[#allocation5 + $0x18] sm:$0xff]
      %v417 = vld [vmem:[#allocation5 + $0x20] sm:$0xff]
      %v418 = vld [vmem:[#allocation5 + $0x28] sm:$0xff]
      %v419 = vld [vmem:[#allocation5 + $0x30] sm:$0xff]
      %v420 = vld [vmem:[#allocation5 + $0x38] sm:$0xff]
      %v421 = vld [vmem:[#allocation5 + $0x40] sm:$0xff]
      %v422 = vld [vmem:[#allocation5 + $0x48] sm:$0xff]
      %v423 = vld [vmem:[#allocation5 + $0x50] sm:$0xff]
      %v424 = vld [vmem:[#allocation5 + $0x58] sm:$0xff]
      %v425 = vld [vmem:[#allocation5 + $0x60] sm:$0xff]
      %v426 = vld [vmem:[#allocation5 + $0x68] sm:$0xff]
      %v427 = vld [vmem:[#allocation5 + $0x70] sm:$0xff]
      %v428 = vld [vmem:[#allocation5 + $0x78] sm:$0xff]
      %v429 = vld [vmem:[%s6] sm:$0x1]
      %v431 = vperm.slane %v429, 0
      %433 = vmatpush.msra.mxu0 %v428
      %434 = vmatpush.msra.mxu0 %v427
      %435 = vmatpush.msra.mxu0 %v426
      %436 = vmatpush.msra.mxu0 %v425
      %437 = vmatpush.msra.mxu0 %v424
      %438 = vmatpush.msra.mxu0 %v423
      %439 = vmatpush.msra.mxu0 %v422
      %440 = vmatpush.msra.mxu0 %v421
      %441 = vmatpush.msra.mxu0 %v420
      %442 = vmatpush.msra.mxu0 %v419
      %443 = vmatpush.msra.mxu0 %v418
      %444 = vmatpush.msra.mxu0 %v417
      %445 = vmatpush.msra.mxu0 %v416
      %446 = vmatpush.msra.mxu0 %v415
      %447 = vmatpush.msra.mxu0 %v414
      %448 = vmatpush.msra.mxu0 %v413
      %449 = vmatmul.f32.gmra.mxu0 %v412
      %v450 = vpop.f32.mrf.mxu0
      %v451 = vadd.f32 %v431, %v450
      %452 = vdwg.mxu0
      %v453 = vmax.f32 %v451, 0.0
      %454 = vst [vmem:[%s7] sm:$0xff] %v453
    $region45: #{net_forward.1} parent=1 // pred_fallthru
      _
    // Predicated region
    $region46: #{net_forward.1} parent=1 // pred_check
      _
    $region47: #{net_forward.1} parent=1 // pred_check_branch
      %456 = sbr.rel (0) target = $region49
    $region48: #{net_forward.1} parent=1 // pred_region
      _
    $region49: #{net_forward.1} parent=1 // pred_fallthru
      _
    // Predicated region
    $region50: #{net_forward.1} parent=1 // pred_check
      _
    $region51: #{net_forward.1} parent=1 // pred_check_branch
      %458 = sbr.rel (0) target = $region53
    $region52: #{net_forward.1} parent=1 // pred_region
      _
    $region53: #{net_forward.1} parent=1 // pred_fallthru
      _
    %459 = vsyncpa [#allocation4], 1
    %460 = vsyncpa [#allocation6], 1

// kernel: net_forward.1
$region0: #{net_forward.1}
  #allocation0 [shape = 'u32[]', space=smem, size = 0x4, offset = 0x4, fixed_abs, tag = 'smem constant byte address 0x4 - core index']
  #allocation1 [shape = 'u32[72,128]{1,0:T(1,128)}', space=vmem, size = 0x9000, scoped, tag = 'internal scratch']
  #allocation2 [shape = 'f32[8,128]{1,0:T(8,128)}', space=vmem, size = 0x1000, scoped, tag = 'scratch operand']
  %s0 = inlined_call_operand.vmem [shape: f32[8,1024], index: 0, kind: input, shape index: {}]
  %s1 = inlined_call_operand.hbm [shape: f32[1024,128], index: 1, kind: input, shape index: {}]
  %s2 = inlined_call_operand.vmem [shape: f32[1,128], index: 2, kind: input, shape index: {}]
  %s3 = inlined_call_operand.vmem [shape: f32[128,128], index: 3, kind: input, shape index: {}]
  %s4 = inlined_call_operand.vmem [shape: f32[1,128], index: 4, kind: input, shape index: {}]
  %s5 = inlined_call_operand.hbm [shape: f32[128,128], index: 5, kind: input, shape index: {}]
  %s6 = inlined_call_operand.vmem [shape: f32[1,128], index: 6, kind: input, shape index: {}]
  %s7 = inlined_call_operand.vmem [shape: f32[8,128], index: 7, kind: output, shape index: {}]
  %s8 = sld [smem:[#allocation0]]
  $region54: #{net_forward.1} parent=0
    _
  %s10 = ssub.s32 1, %s8
  %s11 = scalar_select 0, %s10, %s8
  $region1: #{net_forward.1} parent=0
    #allocation3 [shape = 'u8[524288]{0}', space=vmem, size = 0x80000, scoped, tag = 'input window, operand 1, single buffered']
    #allocation4 [shape = 's32[1]{0}', space=sflag, size = 0x4, scoped, tag = 'scoped memory for net_forward.1']
    #allocation5 [shape = 'u8[65536]{0}', space=vmem, size = 0x10000, scoped, tag = 'input window, operand 5, single buffered']
    #allocation6 [shape = 's32[1]{0}', space=sflag, size = 0x4, scoped, tag = 'scoped memory for net_forward.1']
    %12 = vsyncpa [#allocation4], 0
    %13 = vsyncpa [#allocation6], 0
    // Predicated region
    $region2: #{net_forward.1} parent=1 // pred_check
      _
    $region3: #{net_forward.1} parent=1 // pred_check_branch
      %15 = sbr.rel (0) target = $region5
    $region4: #{net_forward.1} parent=1 // pred_region
      _
    $region5: #{net_forward.1} parent=1 // pred_fallthru
      _
    // Predicated region
    $region6: #{net_forward.1} parent=1 // pred_check
      _
    $region7: #{net_forward.1} parent=1 // pred_check_branch
      %17 = sbr.rel (0) target = $region9
    $region8: #{net_forward.1} parent=1 // pred_region
      %19 = vsyncadd [#allocation4], 0
      %s20 = sshll.u32 %s1, 4
      %s21 = int_to_ptr.hbm [resolvable:$true] %s20
      %s22 = sshll.u32 [#allocation3], 4
      %s23 = int_to_ptr.vmem [resolvable:$true] %s22
      %28 = dma.hbm_to_vmem [thread:$0]  %s21, 16384, %s23, [#allocation4], 128, 128, 8
    $region9: #{net_forward.1} parent=1 // pred_fallthru
      _
    // Predicated region
    $region10: #{net_forward.1} parent=1 // pred_check
      _
    $region11: #{net_forward.1} parent=1 // pred_check_branch
      %30 = sbr.rel (0) target = $region13
    $region12: #{net_forward.1} parent=1 // pred_region
      _
    $region13: #{net_forward.1} parent=1 // pred_fallthru
      _
    // Predicated region
    $region14: #{net_forward.1} parent=1 // pred_check
      _
    $region15: #{net_forward.1} parent=1 // pred_check_branch
      %32 = sbr.rel (0) target = $region17
    $region16: #{net_forward.1} parent=1 // pred_region
      _
    $region17: #{net_forward.1} parent=1 // pred_fallthru
      _
    // Predicated region
    $region18: #{net_forward.1} parent=1 // pred_check
      _
    $region19: #{net_forward.1} parent=1 // pred_check_branch
      %34 = sbr.rel (0) target = $region21
    $region20: #{net_forward.1} parent=1 // pred_region
      _
    $region21: #{net_forward.1} parent=1 // pred_fallthru
      _
    // Predicated region
    $region22: #{net_forward.1} parent=1 // pred_check
      _
    $region23: #{net_forward.1} parent=1 // pred_check_branch
      %36 = sbr.rel (0) target = $region25
    $region24: #{net_forward.1} parent=1 // pred_region
      %38 = vsyncadd [#allocation6], 0
      %s39 = sshll.u32 %s5, 4
      %s40 = int_to_ptr.hbm [resolvable:$true] %s39
      %s41 = sshll.u32 [#allocation5], 4
      %s42 = int_to_ptr.vmem [resolvable:$true] %s41
      %47 = dma.hbm_to_vmem [thread:$0]  %s40, 2048, %s42, [#allocation6], 128, 128, 8
    $region25: #{net_forward.1} parent=1 // pred_fallthru
      _
    // Predicated region
    $region26: #{net_forward.1} parent=1 // pred_check
      _
    $region27: #{net_forward.1} parent=1 // pred_check_branch
      %49 = sbr.rel (0) target = $region29
    $region28: #{net_forward.1} parent=1 // pred_region
      _
    $region29: #{net_forward.1} parent=1 // pred_fallthru
      _
    // Predicated region
    $region30: #{net_forward.1} parent=1 // pred_check
      _
    $region31: #{net_forward.1} parent=1 // pred_check_branch
      %51 = sbr.rel (0) target = $region33
    $region32: #{net_forward.1} parent=1 // pred_region
      %53 = dma.done [#allocation4], 16384
    $region33: #{net_forward.1} parent=1 // pred_fallthru
      _
    // Predicated region
    $region34: #{net_forward.1} parent=1 // pred_check
      _
    $region35: #{net_forward.1} parent=1 // pred_check_branch
      %55 = sbr.rel (0) target = $region37
    $region36: #{net_forward.1} parent=1 // pred_region
      %57 = dma.done [#allocation6], 2048
    $region37: #{net_forward.1} parent=1 // pred_fallthru
      _
    %p58 = scmp.eq.s32.totalorder 0, 0
    // Predicated region
    $region38: #{net_forward.1} parent=1 // pred_check
      %p59 = pneg %p58
    $region39: #{net_forward.1} parent=1 // pred_check_branch
      %61 = sbr.rel (%p59) target = $region41
    $region40: #{net_forward.1} parent=1 // pred_region
      %62 = vst [vmem:[#allocation2] sm:$0xff] 0.0
    $region41: #{net_forward.1} parent=1 // pred_fallthru
      _
    %v63 = vld [vmem:[#allocation2] sm:$0xff]
    %v64 = vld [vmem:[%s0] sm:$0xff]
    %v65 = vld [vmem:[%s0 + $0x8] sm:$0xff]
    %v66 = vld [vmem:[%s0 + $0x10] sm:$0xff]
    %v67 = vld [vmem:[%s0 + $0x18] sm:$0xff]
    %v68 = vld [vmem:[%s0 + $0x20] sm:$0xff]
    %v69 = vld [vmem:[%s0 + $0x28] sm:$0xff]
    %v70 = vld [vmem:[%s0 + $0x30] sm:$0xff]
    %v71 = vld [vmem:[%s0 + $0x38] sm:$0xff]
    %v72 = vld [vmem:[#allocation3] sm:$0xff]
    %v73 = vld [vmem:[#allocation3 + $0x8] sm:$0xff]
    %v74 = vld [vmem:[#allocation3 + $0x10] sm:$0xff]
    %v75 = vld [vmem:[#allocation3 + $0x18] sm:$0xff]
    %v76 = vld [vmem:[#allocation3 + $0x20] sm:$0xff]
    %v77 = vld [vmem:[#allocation3 + $0x28] sm:$0xff]
    %v78 = vld [vmem:[#allocation3 + $0x30] sm:$0xff]
    %v79 = vld [vmem:[#allocation3 + $0x38] sm:$0xff]
    %v80 = vld [vmem:[#allocation3 + $0x40] sm:$0xff]
    %v81 = vld [vmem:[#allocation3 + $0x48] sm:$0xff]
    %v82 = vld [vmem:[#allocation3 + $0x50] sm:$0xff]
    %v83 = vld [vmem:[#allocation3 + $0x58] sm:$0xff]
    %v84 = vld [vmem:[#allocation3 + $0x60] sm:$0xff]
    %v85 = vld [vmem:[#allocation3 + $0x68] sm:$0xff]
    %v86 = vld [vmem:[#allocation3 + $0x70] sm:$0xff]
    %v87 = vld [vmem:[#allocation3 + $0x78] sm:$0xff]
    %v88 = vld [vmem:[#allocation3 + $0x80] sm:$0xff]
    %v89 = vld [vmem:[#allocation3 + $0x88] sm:$0xff]
    %v90 = vld [vmem:[#allocation3 + $0x90] sm:$0xff]
    %v91 = vld [vmem:[#allocation3 + $0x98] sm:$0xff]
    %v92 = vld [vmem:[#allocation3 + $0xa0] sm:$0xff]
    %v93 = vld [vmem:[#allocation3 + $0xa8] sm:$0xff]
    %v94 = vld [vmem:[#allocation3 + $0xb0] sm:$0xff]
    %v95 = vld [vmem:[#allocation3 + $0xb8] sm:$0xff]
    %v96 = vld [vmem:[#allocation3 + $0xc0] sm:$0xff]
    %v97 = vld [vmem:[#allocation3 + $0xc8] sm:$0xff]
    %v98 = vld [vmem:[#allocation3 + $0xd0] sm:$0xff]
    %v99 = vld [vmem:[#allocation3 + $0xd8] sm:$0xff]
    %v100 = vld [vmem:[#allocation3 + $0xe0] sm:$0xff]
    %v101 = vld [vmem:[#allocation3 + $0xe8] sm:$0xff]
    %v102 = vld [vmem:[#allocation3 + $0xf0] sm:$0xff]
    %v103 = vld [vmem:[#allocation3 + $0xf8] sm:$0xff]
    %v104 = vld [vmem:[#allocation3 + $0x100] sm:$0xff]
    %v105 = vld [vmem:[#allocation3 + $0x108] sm:$0xff]
    %v106 = vld [vmem:[#allocation3 + $0x110] sm:$0xff]
    %v107 = vld [vmem:[#allocation3 + $0x118] sm:$0xff]
    %v108 = vld [vmem:[#allocation3 + $0x120] sm:$0xff]
    %v109 = vld [vmem:[#allocation3 + $0x128] sm:$0xff]
    %v110 = vld [vmem:[#allocation3 + $0x130] sm:$0xff]
    %v111 = vld [vmem:[#allocation3 + $0x138] sm:$0xff]
    %v112 = vld [vmem:[#allocation3 + $0x140] sm:$0xff]
    %v113 = vld [vmem:[#allocation3 + $0x148] sm:$0xff]
    %v114 = vld [vmem:[#allocation3 + $0x150] sm:$0xff]
    %v115 = vld [vmem:[#allocation3 + $0x158] sm:$0xff]
    %v116 = vld [vmem:[#allocation3 + $0x160] sm:$0xff]
    %v117 = vld [vmem:[#allocation3 + $0x168] sm:$0xff]
    %v118 = vld [vmem:[#allocation3 + $0x170] sm:$0xff]
    %v119 = vld [vmem:[#allocation3 + $0x178] sm:$0xff]
    %v120 = vld [vmem:[#allocation3 + $0x180] sm:$0xff]
    %v121 = vld [vmem:[#allocation3 + $0x188] sm:$0xff]
    %v122 = vld [vmem:[#allocation3 + $0x190] sm:$0xff]
    %v123 = vld [vmem:[#allocation3 + $0x198] sm:$0xff]
    %v124 = vld [vmem:[#allocation3 + $0x1a0] sm:$0xff]
    %v125 = vld [vmem:[#allocation3 + $0x1a8] sm:$0xff]
    %v126 = vld [vmem:[#allocation3 + $0x1b0] sm:$0xff]
    %v127 = vld [vmem:[#allocation3 + $0x1b8] sm:$0xff]
    %v128 = vld [vmem:[#allocation3 + $0x1c0] sm:$0xff]
    %v129 = vld [vmem:[#allocation3 + $0x1c8] sm:$0xff]
    %v130 = vld [vmem:[#allocation3 + $0x1d0] sm:$0xff]
    %v131 = vld [vmem:[#allocation3 + $0x1d8] sm:$0xff]
    %v132 = vld [vmem:[#allocation3 + $0x1e0] sm:$0xff]
    %v133 = vld [vmem:[#allocation3 + $0x1e8] sm:$0xff]
    %v134 = vld [vmem:[#allocation3 + $0x1f0] sm:$0xff]
    %v135 = vld [vmem:[#allocation3 + $0x1f8] sm:$0xff]
    %v136 = vld [vmem:[#allocation3 + $0x200] sm:$0xff]
    %v137 = vld [vmem:[#allocation3 + $0x208] sm:$0xff]
    %v138 = vld [vmem:[#allocation3 + $0x210] sm:$0xff]
    %v139 = vld [vmem:[#allocation3 + $0x218] sm:$0xff]
    %v140 = vld [vmem:[#allocation3 + $0x220] sm:$0xff]
    %v141 = vld [vmem:[#allocation3 + $0x228] sm:$0xff]
    %v142 = vld [vmem:[#allocation3 + $0x230] sm:$0xff]
    %v143 = vld [vmem:[#allocation3 + $0x238] sm:$0xff]
    %v144 = vld [vmem:[#allocation3 + $0x240] sm:$0xff]
    %v145 = vld [vmem:[#allocation3 + $0x248] sm:$0xff]
    %v146 = vld [vmem:[#allocation3 + $0x250] sm:$0xff]
    %v147 = vld [vmem:[#allocation3 + $0x258] sm:$0xff]
    %v148 = vld [vmem:[#allocation3 + $0x260] sm:$0xff]
    %v149 = vld [vmem:[#allocation3 + $0x268] sm:$0xff]
    %v150 = vld [vmem:[#allocation3 + $0x270] sm:$0xff]
    %v151 = vld [vmem:[#allocation3 + $0x278] sm:$0xff]
    %v152 = vld [vmem:[#allocation3 + $0x280] sm:$0xff]
    %v153 = vld [vmem:[#allocation3 + $0x288] sm:$0xff]
    %v154 = vld [vmem:[#allocation3 + $0x290] sm:$0xff]
    %v155 = vld [vmem:[#allocation3 + $0x298] sm:$0xff]
    %v156 = vld [vmem:[#allocation3 + $0x2a0] sm:$0xff]
    %v157 = vld [vmem:[#allocation3 + $0x2a8] sm:$0xff]
    %v158 = vld [vmem:[#allocation3 + $0x2b0] sm:$0xff]
    %v159 = vld [vmem:[#allocation3 + $0x2b8] sm:$0xff]
    %v160 = vld [vmem:[#allocation3 + $0x2c0] sm:$0xff]
    %v161 = vld [vmem:[#allocation3 + $0x2c8] sm:$0xff]
    %v162 = vld [vmem:[#allocation3 + $0x2d0] sm:$0xff]
    %v163 = vld [vmem:[#allocation3 + $0x2d8] sm:$0xff]
    %v164 = vld [vmem:[#allocation3 + $0x2e0] sm:$0xff]
    %v165 = vld [vmem:[#allocation3 + $0x2e8] sm:$0xff]
    %v166 = vld [vmem:[#allocation3 + $0x2f0] sm:$0xff]
    %v167 = vld [vmem:[#allocation3 + $0x2f8] sm:$0xff]
    %v168 = vld [vmem:[#allocation3 + $0x300] sm:$0xff]
    %v169 = vld [vmem:[#allocation3 + $0x308] sm:$0xff]
    %v170 = vld [vmem:[#allocation3 + $0x310] sm:$0xff]
    %v171 = vld [vmem:[#allocation3 + $0x318] sm:$0xff]
    %v172 = vld [vmem:[#allocation3 + $0x320] sm:$0xff]
    %v173 = vld [vmem:[#allocation3 + $0x328] sm:$0xff]
    %v174 = vld [vmem:[#allocation3 + $0x330] sm:$0xff]
    %v175 = vld [vmem:[#allocation3 + $0x338] sm:$0xff]
    %v176 = vld [vmem:[#allocation3 + $0x340] sm:$0xff]
    %v177 = vld [vmem:[#allocation3 + $0x348] sm:$0xff]
    %v178 = vld [vmem:[#allocation3 + $0x350] sm:$0xff]
    %v179 = vld [vmem:[#allocation3 + $0x358] sm:$0xff]
    %v180 = vld [vmem:[#allocation3 + $0x360] sm:$0xff]
    %v181 = vld [vmem:[#allocation3 + $0x368] sm:$0xff]
    %v182 = vld [vmem:[#allocation3 + $0x370] sm:$0xff]
    %v183 = vld [vmem:[#allocation3 + $0x378] sm:$0xff]
    %v184 = vld [vmem:[#allocation3 + $0x380] sm:$0xff]
    %v185 = vld [vmem:[#allocation3 + $0x388] sm:$0xff]
    %v186 = vld [vmem:[#allocation3 + $0x390] sm:$0xff]
    %v187 = vld [vmem:[#allocation3 + $0x398] sm:$0xff]
    %v188 = vld [vmem:[#allocation3 + $0x3a0] sm:$0xff]
    %v189 = vld [vmem:[#allocation3 + $0x3a8] sm:$0xff]
    %v190 = vld [vmem:[#allocation3 + $0x3b0] sm:$0xff]
    %v191 = vld [vmem:[#allocation3 + $0x3b8] sm:$0xff]
    %v192 = vld [vmem:[#allocation3 + $0x3c0] sm:$0xff]
    %v193 = vld [vmem:[#allocation3 + $0x3c8] sm:$0xff]
    %v194 = vld [vmem:[#allocation3 + $0x3d0] sm:$0xff]
    %v195 = vld [vmem:[#allocation3 + $0x3d8] sm:$0xff]
    %v196 = vld [vmem:[#allocation3 + $0x3e0] sm:$0xff]
    %v197 = vld [vmem:[#allocation3 + $0x3e8] sm:$0xff]
    %v198 = vld [vmem:[#allocation3 + $0x3f0] sm:$0xff]
    %v199 = vld [vmem:[#allocation3 + $0x3f8] sm:$0xff]
    %200 = vmatpush.msra.mxu0 %v87
    %201 = vmatpush.msra.mxu0 %v86
    %202 = vmatpush.msra.mxu0 %v85
    %203 = vmatpush.msra.mxu0 %v84
    %204 = vmatpush.msra.mxu0 %v83
    %205 = vmatpush.msra.mxu0 %v82
    %206 = vmatpush.msra.mxu0 %v81
    %207 = vmatpush.msra.mxu0 %v80
    %208 = vmatpush.msra.mxu0 %v79
    %209 = vmatpush.msra.mxu0 %v78
    %210 = vmatpush.msra.mxu0 %v77
    %211 = vmatpush.msra.mxu0 %v76
    %212 = vmatpush.msra.mxu0 %v75
    %213 = vmatpush.msra.mxu0 %v74
    %214 = vmatpush.msra.mxu0 %v73
    %215 = vmatpush.msra.mxu0 %v72
    %216 = vmatmul.f32.gmra.mxu0 %v64
    %v217 = vpop.f32.mrf.mxu0
    %v218 = vadd.f32 0.0, %v217
    %219 = vdwg.mxu0
    %220 = vmatpush.msra.mxu0 %v103
    %221 = vmatpush.msra.mxu0 %v102
    %222 = vmatpush.msra.mxu0 %v101
    %223 = vmatpush.msra.mxu0 %v100
    %224 = vmatpush.msra.mxu0 %v99
    %225 = vmatpush.msra.mxu0 %v98
    %226 = vmatpush.msra.mxu0 %v97
    %227 = vmatpush.msra.mxu0 %v96
    %228 = vmatpush.msra.mxu0 %v95
    %229 = vmatpush.msra.mxu0 %v94
    %230 = vmatpush.msra.mxu0 %v93
    %231 = vmatpush.msra.mxu0 %v92
    %232 = vmatpush.msra.mxu0 %v91
    %233 = vmatpush.msra.mxu0 %v90
    %234 = vmatpush.msra.mxu0 %v89
    %235 = vmatpush.msra.mxu0 %v88
    %236 = vmatmul.f32.gmra.mxu0 %v65
    %v237 = vpop.f32.mrf.mxu0
    %v238 = vadd.f32 %v218, %v237
    %239 = vdwg.mxu0
    %240 = vmatpush.msra.mxu0 %v119
    %241 = vmatpush.msra.mxu0 %v118
    %242 = vmatpush.msra.mxu0 %v117
    %243 = vmatpush.msra.mxu0 %v116
    %244 = vmatpush.msra.mxu0 %v115
    %245 = vmatpush.msra.mxu0 %v114
    %246 = vmatpush.msra.mxu0 %v113
    %247 = vmatpush.msra.mxu0 %v112
    %248 = vmatpush.msra.mxu0 %v111
    %249 = vmatpush.msra.mxu0 %v110
    %250 = vmatpush.msra.mxu0 %v109
    %251 = vmatpush.msra.mxu0 %v108
    %252 = vmatpush.msra.mxu0 %v107
    %253 = vmatpush.msra.mxu0 %v106
    %254 = vmatpush.msra.mxu0 %v105
    %255 = vmatpush.msra.mxu0 %v104
    %256 = vmatmul.f32.gmra.mxu0 %v66
    %v257 = vpop.f32.mrf.mxu0
    %v258 = vadd.f32 %v238, %v257
    %259 = vdwg.mxu0
    %260 = vmatpush.msra.mxu0 %v135
    %261 = vmatpush.msra.mxu0 %v134
    %262 = vmatpush.msra.mxu0 %v133
    %263 = vmatpush.msra.mxu0 %v132
    %264 = vmatpush.msra.mxu0 %v131
    %265 = vmatpush.msra.mxu0 %v130
    %266 = vmatpush.msra.mxu0 %v129
    %267 = vmatpush.msra.mxu0 %v128
    %268 = vmatpush.msra.mxu0 %v127
    %269 = vmatpush.msra.mxu0 %v126
    %270 = vmatpush.msra.mxu0 %v125
    %271 = vmatpush.msra.mxu0 %v124
    %272 = vmatpush.msra.mxu0 %v123
    %273 = vmatpush.msra.mxu0 %v122
    %274 = vmatpush.msra.mxu0 %v121
    %275 = vmatpush.msra.mxu0 %v120
    %276 = vmatmul.f32.gmra.mxu0 %v67
    %v277 = vpop.f32.mrf.mxu0
    %v278 = vadd.f32 %v258, %v277
    %279 = vdwg.mxu0
    %280 = vmatpush.msra.mxu0 %v151
    %281 = vmatpush.msra.mxu0 %v150
    %282 = vmatpush.msra.mxu0 %v149
    %283 = vmatpush.msra.mxu0 %v148
    %284 = vmatpush.msra.mxu0 %v147
    %285 = vmatpush.msra.mxu0 %v146
    %286 = vmatpush.msra.mxu0 %v145
    %287 = vmatpush.msra.mxu0 %v144
    %288 = vmatpush.msra.mxu0 %v143
    %289 = vmatpush.msra.mxu0 %v142
    %290 = vmatpush.msra.mxu0 %v141
    %291 = vmatpush.msra.mxu0 %v140
    %292 = vmatpush.msra.mxu0 %v139
    %293 = vmatpush.msra.mxu0 %v138
    %294 = vmatpush.msra.mxu0 %v137
    %295 = vmatpush.msra.mxu0 %v136
    %296 = vmatmul.f32.gmra.mxu0 %v68
    %v297 = vpop.f32.mrf.mxu0
    %v298 = vadd.f32 %v278, %v297
    %299 = vdwg.mxu0
    %300 = vmatpush.msra.mxu0 %v167
    %301 = vmatpush.msra.mxu0 %v166
    %302 = vmatpush.msra.mxu0 %v165
    %303 = vmatpush.msra.mxu0 %v164
    %304 = vmatpush.msra.mxu0 %v163
    %305 = vmatpush.msra.mxu0 %v162
    %306 = vmatpush.msra.mxu0 %v161
    %307 = vmatpush.msra.mxu0 %v160
    %308 = vmatpush.msra.mxu0 %v159
    %309 = vmatpush.msra.mxu0 %v158
    %310 = vmatpush.msra.mxu0 %v157
    %311 = vmatpush.msra.mxu0 %v156
    %312 = vmatpush.msra.mxu0 %v155
    %313 = vmatpush.msra.mxu0 %v154
    %314 = vmatpush.msra.mxu0 %v153
    %315 = vmatpush.msra.mxu0 %v152
    %316 = vmatmul.f32.gmra.mxu0 %v69
    %v317 = vpop.f32.mrf.mxu0
    %v318 = vadd.f32 %v298, %v317
    %319 = vdwg.mxu0
    %320 = vmatpush.msra.mxu0 %v183
    %321 = vmatpush.msra.mxu0 %v182
    %322 = vmatpush.msra.mxu0 %v181
    %323 = vmatpush.msra.mxu0 %v180
    %324 = vmatpush.msra.mxu0 %v179
    %325 = vmatpush.msra.mxu0 %v178
    %326 = vmatpush.msra.mxu0 %v177
    %327 = vmatpush.msra.mxu0 %v176
    %328 = vmatpush.msra.mxu0 %v175
    %329 = vmatpush.msra.mxu0 %v174
    %330 = vmatpush.msra.mxu0 %v173
    %331 = vmatpush.msra.mxu0 %v172
    %332 = vmatpush.msra.mxu0 %v171
    %333 = vmatpush.msra.mxu0 %v170
    %334 = vmatpush.msra.mxu0 %v169
    %335 = vmatpush.msra.mxu0 %v168
    %336 = vmatmul.f32.gmra.mxu0 %v70
    %v337 = vpop.f32.mrf.mxu0
    %v338 = vadd.f32 %v318, %v337
    %339 = vdwg.mxu0
    %340 = vmatpush.msra.mxu0 %v199
    %341 = vmatpush.msra.mxu0 %v198
    %342 = vmatpush.msra.mxu0 %v197
    %343 = vmatpush.msra.mxu0 %v196
    %344 = vmatpush.msra.mxu0 %v195
    %345 = vmatpush.msra.mxu0 %v194
    %346 = vmatpush.msra.mxu0 %v193
    %347 = vmatpush.msra.mxu0 %v192
    %348 = vmatpush.msra.mxu0 %v191
    %349 = vmatpush.msra.mxu0 %v190
    %350 = vmatpush.msra.mxu0 %v189
    %351 = vmatpush.msra.mxu0 %v188
    %352 = vmatpush.msra.mxu0 %v187
    %353 = vmatpush.msra.mxu0 %v186
    %354 = vmatpush.msra.mxu0 %v185
    %355 = vmatpush.msra.mxu0 %v184
    %356 = vmatmul.f32.gmra.mxu0 %v71
    %v357 = vpop.f32.mrf.mxu0
    %v358 = vadd.f32 %v338, %v357
    %359 = vdwg.mxu0
    %v360 = vadd.f32 %v63, %v358
    %361 = vst [vmem:[#allocation2] sm:$0xff] %v360
    // Predicated region
    $region42: #{net_forward.1} parent=1 // pred_check
      %p362 = pneg %p58
    $region43: #{net_forward.1} parent=1 // pred_check_branch
      %364 = sbr.rel (%p362) target = $region45
    $region44: #{net_forward.1} parent=1 // pred_region
      %v365 = vld [vmem:[#allocation2] sm:$0xff]
      %v366 = vld [vmem:[%s2] sm:$0x1]
      %v368 = vperm.slane %v366, 0
      %v370 = vadd.f32 %v365, %v368
      %v371 = vmax.f32 %v370, 0.0
      %v372 = vld [vmem:[%s3] sm:$0xff]
      %v373 = vld [vmem:[%s3 + $0x8] sm:$0xff]
      %v374 = vld [vmem:[%s3 + $0x10] sm:$0xff]
      %v375 = vld [vmem:[%s3 + $0x18] sm:$0xff]
      %v376 = vld [vmem:[%s3 + $0x20] sm:$0xff]
      %v377 = vld [vmem:[%s3 + $0x28] sm:$0xff]
      %v378 = vld [vmem:[%s3 + $0x30] sm:$0xff]
      %v379 = vld [vmem:[%s3 + $0x38] sm:$0xff]
      %v380 = vld [vmem:[%s3 + $0x40] sm:$0xff]
      %v381 = vld [vmem:[%s3 + $0x48] sm:$0xff]
      %v382 = vld [vmem:[%s3 + $0x50] sm:$0xff]
      %v383 = vld [vmem:[%s3 + $0x58] sm:$0xff]
      %v384 = vld [vmem:[%s3 + $0x60] sm:$0xff]
      %v385 = vld [vmem:[%s3 + $0x68] sm:$0xff]
      %v386 = vld [vmem:[%s3 + $0x70] sm:$0xff]
      %v387 = vld [vmem:[%s3 + $0x78] sm:$0xff]
      %v388 = vld [vmem:[%s4] sm:$0x1]
      %v390 = vperm.slane %v388, 0
      %392 = vmatpush.msra.mxu0 %v387
      %393 = vmatpush.msra.mxu0 %v386
      %394 = vmatpush.msra.mxu0 %v385
      %395 = vmatpush.msra.mxu0 %v384
      %396 = vmatpush.msra.mxu0 %v383
      %397 = vmatpush.msra.mxu0 %v382
      %398 = vmatpush.msra.mxu0 %v381
      %399 = vmatpush.msra.mxu0 %v380
      %400 = vmatpush.msra.mxu0 %v379
      %401 = vmatpush.msra.mxu0 %v378
      %402 = vmatpush.msra.mxu0 %v377
      %403 = vmatpush.msra.mxu0 %v376
      %404 = vmatpush.msra.mxu0 %v375
      %405 = vmatpush.msra.mxu0 %v374
      %406 = vmatpush.msra.mxu0 %v373
      %407 = vmatpush.msra.mxu0 %v372
      %408 = vmatmul.f32.gmra.mxu0 %v371
      %v409 = vpop.f32.mrf.mxu0
      %v410 = vadd.f32 %v390, %v409
      %411 = vdwg.mxu0
      %v412 = vmax.f32 %v410, 0.0
      %v413 = vld [vmem:[#allocation5] sm:$0xff]
      %v414 = vld [vmem:[#allocation5 + $0x8] sm:$0xff]
      %v415 = vld [vmem:[#allocation5 + $0x10] sm:$0xff]
      %v416 = vld [vmem:[#allocation5 + $0x18] sm:$0xff]
      %v417 = vld [vmem:[#allocation5 + $0x20] sm:$0xff]
      %v418 = vld [vmem:[#allocation5 + $0x28] sm:$0xff]
      %v419 = vld [vmem:[#allocation5 + $0x30] sm:$0xff]
      %v420 = vld [vmem:[#allocation5 + $0x38] sm:$0xff]
      %v421 = vld [vmem:[#allocation5 + $0x40] sm:$0xff]
      %v422 = vld [vmem:[#allocation5 + $0x48] sm:$0xff]
      %v423 = vld [vmem:[#allocation5 + $0x50] sm:$0xff]
      %v424 = vld [vmem:[#allocation5 + $0x58] sm:$0xff]
      %v425 = vld [vmem:[#allocation5 + $0x60] sm:$0xff]
      %v426 = vld [vmem:[#allocation5 + $0x68] sm:$0xff]
      %v427 = vld [vmem:[#allocation5 + $0x70] sm:$0xff]
      %v428 = vld [vmem:[#allocation5 + $0x78] sm:$0xff]
      %v429 = vld [vmem:[%s6] sm:$0x1]
      %v431 = vperm.slane %v429, 0
      %433 = vmatpush.msra.mxu0 %v428
      %434 = vmatpush.msra.mxu0 %v427
      %435 = vmatpush.msra.mxu0 %v426
      %436 = vmatpush.msra.mxu0 %v425
      %437 = vmatpush.msra.mxu0 %v424
      %438 = vmatpush.msra.mxu0 %v423
      %439 = vmatpush.msra.mxu0 %v422
      %440 = vmatpush.msra.mxu0 %v421
      %441 = vmatpush.msra.mxu0 %v420
      %442 = vmatpush.msra.mxu0 %v419
      %443 = vmatpush.msra.mxu0 %v418
      %444 = vmatpush.msra.mxu0 %v417
      %445 = vmatpush.msra.mxu0 %v416
      %446 = vmatpush.msra.mxu0 %v415
      %447 = vmatpush.msra.mxu0 %v414
      %448 = vmatpush.msra.mxu0 %v413
      %449 = vmatmul.f32.gmra.mxu0 %v412
      %v450 = vpop.f32.mrf.mxu0
      %v451 = vadd.f32 %v431, %v450
      %452 = vdwg.mxu0
      %v453 = vmax.f32 %v451, 0.0
      %454 = vst [vmem:[%s7] sm:$0xff] %v453
    $region45: #{net_forward.1} parent=1 // pred_fallthru
      _
    // Predicated region
    $region46: #{net_forward.1} parent=1 // pred_check
      _
    $region47: #{net_forward.1} parent=1 // pred_check_branch
      %456 = sbr.rel (0) target = $region49
    $region48: #{net_forward.1} parent=1 // pred_region
      _
    $region49: #{net_forward.1} parent=1 // pred_fallthru
      _
    // Predicated region
    $region50: #{net_forward.1} parent=1 // pred_check
      _
    $region51: #{net_forward.1} parent=1 // pred_check_branch
      %458 = sbr.rel (0) target = $region53
    $region52: #{net_forward.1} parent=1 // pred_region
      _
    $region53: #{net_forward.1} parent=1 // pred_fallthru
      _
    %459 = vsyncpa [#allocation4], 1
    %460 = vsyncpa [#allocation6], 1

</llo_original>
